<compile_context>
chip_gen: v6e
topology: v6e:2x2x1
jax: 0.10.0
libtpu: 0.0.40
codegen_flags: <defaults>
</compile_context>

<pallas_src>
import functools

import jax
import jax.numpy as jnp
from jax.experimental import pallas as pl
from jax.experimental.pallas import tpu as pltpu


# ----------------------------------------------------------------------------
# Fused kernel: LSTM recurrence + multi-head self-attention + (fused) residual
#               + output Linear + log_softmax, all resident in VMEM.
# ----------------------------------------------------------------------------
def ner_fused_kernel(x_ref, wih_ref, whh_ref, bl_ref, win_ref, bin_ref,
                     wfin_ref, wof_ref, bfo_ref, out_ref,
                     *, seq_t, batch_n, hidden, num_heads, head_dim):
    T, N, H, NH, HD = seq_t, batch_n, hidden, num_heads, head_dim
    R = T * N

    # ---------- LSTM: input-side projection hoisted into ONE MXU call --------
    xg = jnp.dot(x_ref[...].astype(jnp.bfloat16), wih_ref[...],
                 preferred_element_type=jnp.float32) + bl_ref[...]        # [R, 4H]
    w_hh = whh_ref[...]                                                    # [H, 4H] bf16

    h = jnp.zeros((N, H), jnp.float32)
    c = jnp.zeros((N, H), jnp.float32)
    h_steps = []
    for t in range(T):    # tiny static T -> full unroll (see TODO for large T)
        gates = jnp.dot(h.astype(jnp.bfloat16), w_hh,
                        preferred_element_type=jnp.float32) + xg[t * N:(t + 1) * N, :]
        i_g = jax.nn.sigmoid(gates[:, 0 * H:1 * H])
        f_g = jax.nn.sigmoid(gates[:, 1 * H:2 * H])
        g_g = jnp.tanh(gates[:, 2 * H:3 * H])
        o_g = jax.nn.sigmoid(gates[:, 3 * H:4 * H])
        c = f_g * c + i_g * g_g
        h = o_g * jnp.tanh(c)
        h_steps.append(h)
    lstm_out = jnp.concatenate(h_steps, axis=0)                            # [R, H] f32
    lstm_bf = lstm_out.astype(jnp.bfloat16)

    # ---------- packed QKV in-projection (one matmul) -------------------------
    qkv = jnp.dot(lstm_bf, win_ref[...],
                  preferred_element_type=jnp.float32) + bin_ref[...]       # [R, 3H]

    # ---------- per-head scores (no k.T), sublane-stacked, one masked softmax -
    scale = 1.0 / (HD ** 0.5)
    trans_b = (((1,), (1,)), ((), ()))    # contract last dims: q @ k^T, no transpose
    s_heads = []
    for hh in range(NH):
        q = qkv[:, hh * HD:(hh + 1) * HD].astype(jnp.bfloat16)
        k = qkv[:, H + hh * HD:H + (hh + 1) * HD].astype(jnp.bfloat16)
        s_heads.append(jax.lax.dot_general(q, k, trans_b,
                                           preferred_element_type=jnp.float32))
    s_all = jnp.concatenate(s_heads, axis=0) * scale                       # [NH*R, R]

    # Block-diagonal mask: flat row t*N+n may only attend to columns with the
    # same n.  Generated in-kernel -> no O(R^2) HBM-resident bias input.
    row = jax.lax.broadcasted_iota(jnp.int32, (NH * R, R), 0)
    col = jax.lax.broadcasted_iota(jnp.int32, (NH * R, R), 1)
    s_all = jnp.where((row % N) == (col % N), s_all, -1e30)

    s_all = s_all - jnp.max(s_all, axis=-1, keepdims=True)
    p_all = jnp.exp(s_all)
    p_all = p_all * pl.reciprocal(jnp.sum(p_all, axis=-1, keepdims=True), approx=True)
    p_bf = p_all.astype(jnp.bfloat16)
    # TODO(synk): attention dropout (p=0.1) omitted -- eval-mode semantics.

    # ---------- fused out-proj + residual + final Linear + log_softmax --------
    # logits = lstm_out @ Wf + ctx @ (Wo @ Wf) + (b_o @ Wf + b_f); padded vocab
    # lanes carry zero weights and -1e30 bias, so they vanish under softmax.
    logits = jnp.dot(lstm_bf, wfin_ref[...],
                     preferred_element_type=jnp.float32) + bfo_ref[...]    # [R, Vp]
    for hh in range(NH):
        v = qkv[:, 2 * H + hh * HD:2 * H + (hh + 1) * HD].astype(jnp.bfloat16)
        ctx = jnp.dot(p_bf[hh * R:(hh + 1) * R, :], v,
                      preferred_element_type=jnp.float32)                  # [R, HD]
        logits = logits + jnp.dot(ctx.astype(jnp.bfloat16),
                                  wof_ref[hh * HD:(hh + 1) * HD, :],
                                  preferred_element_type=jnp.float32)

    m = jnp.max(logits, axis=-1, keepdims=True)
    z = logits - m
    lse = jnp.log(jnp.sum(jnp.exp(z), axis=-1, keepdims=True))
    out_ref[...] = z - lse                                                 # lane-dense [R, 128]


# ----------------------------------------------------------------------------
# Parameter construction (deterministic, synthetic) matching the PyTorch module.
# ----------------------------------------------------------------------------
def make_params(key, *, vocab_in, vocab_pos, vocab_out, emb, hidden,
                num_heads, pad_idx, vocab_out_pad):
    ks = jax.random.split(key, 12)
    u = lambda k, shape, s=0.1: jax.random.uniform(k, shape, jnp.float32, -s, s)
    p = {}
    p["tok_emb"] = u(ks[0], (vocab_in, emb)).at[pad_idx].set(0.0)    # padding_idx
    p["pos_emb"] = u(ks[1], (vocab_pos, emb)).at[pad_idx].set(0.0)   # padding_idx

    # LSTM (PyTorch layout: W_ih [4H,2E], W_hh [4H,H], biases [4H]; gates i,f,g,o).
    # Input and hidden projections kept separate so the input side can be hoisted.
    W_ih = u(ks[2], (4 * hidden, 2 * emb))
    W_hh = u(ks[3], (4 * hidden, hidden))
    b_ih = u(ks[4], (4 * hidden,))
    b_hh = u(ks[5], (4 * hidden,))
    p["w_ih"] = W_ih.T.astype(jnp.bfloat16)                          # [2E, 4H]
    p["w_hh"] = W_hh.T.astype(jnp.bfloat16)                          # [H, 4H]
    p["b_lstm"] = (b_ih + b_hh).reshape(1, 4 * hidden)               # [1, 4H] f32

    # MultiheadAttention: in_proj [3H,H] (q|k|v stacked), out_proj [H,H] + [H].
    in_w = u(ks[6], (3 * hidden, hidden))
    in_b = u(ks[7], (3 * hidden,))
    p["w_in"] = in_w.T.astype(jnp.bfloat16)                          # [H, 3H]
    p["b_in"] = in_b.reshape(1, 3 * hidden)
    Wo = u(ks[8], (hidden, hidden))
    bo = u(ks[9], (hidden,))

    # Output Linear H -> V, padded to vocab_out_pad lanes (pad cols: w=0,
    # b=-1e30 so padded logits vanish under softmax; stripped in the wrapper).
    Wfin = u(ks[10], (vocab_out, hidden))
    bfin = u(ks[11], (vocab_out,))
    Wf_T = jnp.zeros((hidden, vocab_out_pad), jnp.float32).at[:, :vocab_out].set(Wfin.T)
    bf_pad = jnp.full((vocab_out_pad,), -1e30, jnp.float32).at[:vocab_out].set(bfin)

    # Algebraic fusion of attention out-projection + residual + final Linear:
    #   logits = lstm @ Wf_T + ctx @ (Wo^T @ Wf_T) + (b_o @ Wf_T + b_fin)
    p["w_fin"] = Wf_T.astype(jnp.bfloat16)                           # [H, Vp]
    p["w_of"] = (Wo.T @ Wf_T).astype(jnp.bfloat16)                   # [H, Vp]
    p["b_fused"] = (bo @ Wf_T + bf_pad).reshape(1, vocab_out_pad)    # [1, Vp] f32
    return p


# ----------------------------------------------------------------------------
# Forward wrapper: embedding lookups (plain JAX glue) + fused Pallas kernel.
# ----------------------------------------------------------------------------
def ner_forward(X, P, params, *, num_heads, head_dim, vocab_out):
    B, S = X.shape
    T, N = B, S                                        # module runs LSTM/MHA over dim 0
    xemb = jnp.take(params["tok_emb"], X, axis=0)      # [T, N, E]
    pemb = jnp.take(params["pos_emb"], P, axis=0)      # [T, N, E]
    combined = jnp.concatenate([xemb, pemb], axis=-1)  # [T, N, 2E]
    R = T * N
    x_flat = combined.reshape(R, combined.shape[-1])   # contiguous slab, row = t*N + n

    H = params["w_hh"].shape[0]
    Vp = params["w_fin"].shape[1]
    kernel = functools.partial(ner_fused_kernel, seq_t=T, batch_n=N, hidden=H,
                               num_heads=num_heads, head_dim=head_dim)
    vmem = pl.BlockSpec(memory_space=pltpu.MemorySpace.VMEM)
    flat_logp = pl.pallas_call(
        kernel,
        out_shape=jax.ShapeDtypeStruct((R, Vp), jnp.float32),
        in_specs=[vmem] * 9,
        out_specs=vmem,
    )(x_flat, params["w_ih"], params["w_hh"], params["b_lstm"],
      params["w_in"], params["b_in"], params["w_fin"], params["w_of"],
      params["b_fused"])

    # [T*N, Vp] -> [B, S, vocab_out]  (strip lane padding; pure layout plumbing)
    return flat_logp.reshape(T, N, Vp)[:, :, :vocab_out]


if __name__ == "__main__":
    B, S = 4, 8          # batch, seq (module's LSTM/MHA recur/attend over dim 0 = B)
    E, H = 16, 32        # embedding_size, hidden_size
    NH = 4               # nb_attn_heads
    HD = H // NH
    V_IN, V_POS, V_OUT = 50, 20, 12
    PAD = 0
    V_PAD = 128          # output vocab padded to one full lane width

    key = jax.random.PRNGKey(0)
    kparams, kx, kp = jax.random.split(key, 3)
    params = make_params(kparams, vocab_in=V_IN, vocab_pos=V_POS, vocab_out=V_OUT,
                         emb=E, hidden=H, num_heads=NH, pad_idx=PAD,
                         vocab_out_pad=V_PAD)

    X = jax.random.randint(kx, (B, S), 0, V_IN, dtype=jnp.int32)
    Ppos = jax.random.randint(kp, (B, S), 0, V_POS, dtype=jnp.int32)

    out = ner_forward(X, Ppos, params, num_heads=NH, head_dim=HD, vocab_out=V_OUT)
    out = jax.block_until_ready(out)

    assert out.shape == (B, S, V_OUT), out.shape
    # rows of log-probs should sum to ~1 after exp
    assert bool(jnp.all(jnp.abs(jnp.sum(jnp.exp(out), axis=-1) - 1.0) < 1e-4))
    print("KERNEL_OK")
</pallas_src>

<mosaic_0001>
module attributes {stable_mosaic.version = 11 : i64} {
  func.func @ner_fused_kernel(%arg0: memref<32x32xf32, #tpu.memory_space<vmem>>, %arg1: memref<32x128xbf16, #tpu.memory_space<vmem>>, %arg2: memref<32x128xbf16, #tpu.memory_space<vmem>>, %arg3: memref<1x128xf32, #tpu.memory_space<vmem>>, %arg4: memref<32x96xbf16, #tpu.memory_space<vmem>>, %arg5: memref<1x96xf32, #tpu.memory_space<vmem>>, %arg6: memref<32x128xbf16, #tpu.memory_space<vmem>>, %arg7: memref<32x128xbf16, #tpu.memory_space<vmem>>, %arg8: memref<1x128xf32, #tpu.memory_space<vmem>>, %arg9: memref<32x128xf32, #tpu.memory_space<vmem>>) attributes {dimension_semantics = [], scalar_prefetch = 0 : i64, scratch_operands = 0 : i64, tpu.core_type = #tpu.core_type<tc>} {
    %c0 = arith.constant 0 : index
    %c0_0 = arith.constant 0 : index
    %0 = vector.load %arg0[%c0, %c0_0] : memref<32x32xf32, #tpu.memory_space<vmem>>, vector<32x32xf32>
    %1 = arith.truncf %0 : vector<32x32xf32> to vector<32x32xbf16>
    %c0_1 = arith.constant 0 : index
    %c0_2 = arith.constant 0 : index
    %2 = vector.load %arg1[%c0_1, %c0_2] : memref<32x128xbf16, #tpu.memory_space<vmem>>, vector<32x128xbf16>
    %cst = arith.constant dense<0.000000e+00> : vector<32x128xf32>
    %3 = tpu.matmul %1, %2, %cst {dimension_numbers = #tpu.dot_dimension_numbers<[1], [0], [0], [1], [0, 0, 1, 1], [], []>} : vector<32x32xbf16>, vector<32x128xbf16>, vector<32x128xf32> -> vector<32x128xf32>
    %c0_3 = arith.constant 0 : index
    %c0_4 = arith.constant 0 : index
    %4 = vector.load %arg3[%c0_3, %c0_4] : memref<1x128xf32, #tpu.memory_space<vmem>>, vector<1x128xf32>
    %5 = vector.broadcast %4 : vector<1x128xf32> to vector<32x128xf32>
    %6 = arith.addf %3, %5 : vector<32x128xf32>
    %c0_5 = arith.constant 0 : index
    %c0_6 = arith.constant 0 : index
    %7 = vector.load %arg2[%c0_5, %c0_6] : memref<32x128xbf16, #tpu.memory_space<vmem>>, vector<32x128xbf16>
    %cst_7 = arith.constant 0.000000e+00 : f32
    %8 = vector.broadcast %cst_7 : f32 to vector<8x32xf32>
    %cst_8 = arith.constant 0.000000e+00 : f32
    %9 = vector.broadcast %cst_8 : f32 to vector<8x32xf32>
    %10 = arith.truncf %8 : vector<8x32xf32> to vector<8x32xbf16>
    %cst_9 = arith.constant dense<0.000000e+00> : vector<8x128xf32>
    %11 = tpu.matmul %10, %7, %cst_9 {dimension_numbers = #tpu.dot_dimension_numbers<[1], [0], [0], [1], [0, 0, 1, 1], [], []>} : vector<8x32xbf16>, vector<32x128xbf16>, vector<8x128xf32> -> vector<8x128xf32>
    %12 = vector.extract_strided_slice %6 {offsets = [0, 0], sizes = [8, 128], strides = [1, 1]} : vector<32x128xf32> to vector<8x128xf32>
    %13 = arith.addf %11, %12 : vector<8x128xf32>
    %14 = vector.extract_strided_slice %13 {offsets = [0, 0], sizes = [8, 32], strides = [1, 1]} : vector<8x128xf32> to vector<8x32xf32>
    %15 = arith.negf %14 : vector<8x32xf32>
    %16 = math.exp %15 : vector<8x32xf32>
    %cst_10 = arith.constant 1.000000e+00 : f32
    %17 = vector.broadcast %cst_10 : f32 to vector<8x32xf32>
    %18 = arith.addf %17, %16 : vector<8x32xf32>
    %19 = arith.divf %17, %18 : vector<8x32xf32>
    %20 = vector.extract_strided_slice %13 {offsets = [0, 32], sizes = [8, 32], strides = [1, 1]} : vector<8x128xf32> to vector<8x32xf32>
    %21 = arith.negf %20 : vector<8x32xf32>
    %22 = math.exp %21 : vector<8x32xf32>
    %cst_11 = arith.constant 1.000000e+00 : f32
    %23 = vector.broadcast %cst_11 : f32 to vector<8x32xf32>
    %24 = arith.addf %23, %22 : vector<8x32xf32>
    %25 = arith.divf %23, %24 : vector<8x32xf32>
    %26 = vector.extract_strided_slice %13 {offsets = [0, 64], sizes = [8, 32], strides = [1, 1]} : vector<8x128xf32> to vector<8x32xf32>
    %27 = math.tanh %26 : vector<8x32xf32>
    %28 = vector.extract_strided_slice %13 {offsets = [0, 96], sizes = [8, 32], strides = [1, 1]} : vector<8x128xf32> to vector<8x32xf32>
    %29 = arith.negf %28 : vector<8x32xf32>
    %30 = math.exp %29 : vector<8x32xf32>
    %cst_12 = arith.constant 1.000000e+00 : f32
    %31 = vector.broadcast %cst_12 : f32 to vector<8x32xf32>
    %32 = arith.addf %31, %30 : vector<8x32xf32>
    %33 = arith.divf %31, %32 : vector<8x32xf32>
    %34 = arith.mulf %25, %9 : vector<8x32xf32>
    %35 = arith.mulf %19, %27 : vector<8x32xf32>
    %36 = arith.addf %34, %35 : vector<8x32xf32>
    %37 = math.tanh %36 : vector<8x32xf32>
    %38 = arith.mulf %33, %37 : vector<8x32xf32>
    %39 = arith.truncf %38 : vector<8x32xf32> to vector<8x32xbf16>
    %cst_13 = arith.constant dense<0.000000e+00> : vector<8x128xf32>
    %40 = tpu.matmul %39, %7, %cst_13 {dimension_numbers = #tpu.dot_dimension_numbers<[1], [0], [0], [1], [0, 0, 1, 1], [], []>} : vector<8x32xbf16>, vector<32x128xbf16>, vector<8x128xf32> -> vector<8x128xf32>
    %41 = vector.extract_strided_slice %6 {offsets = [8, 0], sizes = [8, 128], strides = [1, 1]} : vector<32x128xf32> to vector<8x128xf32>
    %42 = arith.addf %40, %41 : vector<8x128xf32>
    %43 = vector.extract_strided_slice %42 {offsets = [0, 0], sizes = [8, 32], strides = [1, 1]} : vector<8x128xf32> to vector<8x32xf32>
    %44 = arith.negf %43 : vector<8x32xf32>
    %45 = math.exp %44 : vector<8x32xf32>
    %cst_14 = arith.constant 1.000000e+00 : f32
    %46 = vector.broadcast %cst_14 : f32 to vector<8x32xf32>
    %47 = arith.addf %46, %45 : vector<8x32xf32>
    %48 = arith.divf %46, %47 : vector<8x32xf32>
    %49 = vector.extract_strided_slice %42 {offsets = [0, 32], sizes = [8, 32], strides = [1, 1]} : vector<8x128xf32> to vector<8x32xf32>
    %50 = arith.negf %49 : vector<8x32xf32>
    %51 = math.exp %50 : vector<8x32xf32>
    %cst_15 = arith.constant 1.000000e+00 : f32
    %52 = vector.broadcast %cst_15 : f32 to vector<8x32xf32>
    %53 = arith.addf %52, %51 : vector<8x32xf32>
    %54 = arith.divf %52, %53 : vector<8x32xf32>
    %55 = vector.extract_strided_slice %42 {offsets = [0, 64], sizes = [8, 32], strides = [1, 1]} : vector<8x128xf32> to vector<8x32xf32>
    %56 = math.tanh %55 : vector<8x32xf32>
    %57 = vector.extract_strided_slice %42 {offsets = [0, 96], sizes = [8, 32], strides = [1, 1]} : vector<8x128xf32> to vector<8x32xf32>
    %58 = arith.negf %57 : vector<8x32xf32>
    %59 = math.exp %58 : vector<8x32xf32>
    %cst_16 = arith.constant 1.000000e+00 : f32
    %60 = vector.broadcast %cst_16 : f32 to vector<8x32xf32>
    %61 = arith.addf %60, %59 : vector<8x32xf32>
    %62 = arith.divf %60, %61 : vector<8x32xf32>
    %63 = arith.mulf %54, %36 : vector<8x32xf32>
    %64 = arith.mulf %48, %56 : vector<8x32xf32>
    %65 = arith.addf %63, %64 : vector<8x32xf32>
    %66 = math.tanh %65 : vector<8x32xf32>
    %67 = arith.mulf %62, %66 : vector<8x32xf32>
    %68 = arith.truncf %67 : vector<8x32xf32> to vector<8x32xbf16>
    %cst_17 = arith.constant dense<0.000000e+00> : vector<8x128xf32>
    %69 = tpu.matmul %68, %7, %cst_17 {dimension_numbers = #tpu.dot_dimension_numbers<[1], [0], [0], [1], [0, 0, 1, 1], [], []>} : vector<8x32xbf16>, vector<32x128xbf16>, vector<8x128xf32> -> vector<8x128xf32>
    %70 = vector.extract_strided_slice %6 {offsets = [16, 0], sizes = [8, 128], strides = [1, 1]} : vector<32x128xf32> to vector<8x128xf32>
    %71 = arith.addf %69, %70 : vector<8x128xf32>
    %72 = vector.extract_strided_slice %71 {offsets = [0, 0], sizes = [8, 32], strides = [1, 1]} : vector<8x128xf32> to vector<8x32xf32>
    %73 = arith.negf %72 : vector<8x32xf32>
    %74 = math.exp %73 : vector<8x32xf32>
    %cst_18 = arith.constant 1.000000e+00 : f32
    %75 = vector.broadcast %cst_18 : f32 to vector<8x32xf32>
    %76 = arith.addf %75, %74 : vector<8x32xf32>
    %77 = arith.divf %75, %76 : vector<8x32xf32>
    %78 = vector.extract_strided_slice %71 {offsets = [0, 32], sizes = [8, 32], strides = [1, 1]} : vector<8x128xf32> to vector<8x32xf32>
    %79 = arith.negf %78 : vector<8x32xf32>
    %80 = math.exp %79 : vector<8x32xf32>
    %cst_19 = arith.constant 1.000000e+00 : f32
    %81 = vector.broadcast %cst_19 : f32 to vector<8x32xf32>
    %82 = arith.addf %81, %80 : vector<8x32xf32>
    %83 = arith.divf %81, %82 : vector<8x32xf32>
    %84 = vector.extract_strided_slice %71 {offsets = [0, 64], sizes = [8, 32], strides = [1, 1]} : vector<8x128xf32> to vector<8x32xf32>
    %85 = math.tanh %84 : vector<8x32xf32>
    %86 = vector.extract_strided_slice %71 {offsets = [0, 96], sizes = [8, 32], strides = [1, 1]} : vector<8x128xf32> to vector<8x32xf32>
    %87 = arith.negf %86 : vector<8x32xf32>
    %88 = math.exp %87 : vector<8x32xf32>
    %cst_20 = arith.constant 1.000000e+00 : f32
    %89 = vector.broadcast %cst_20 : f32 to vector<8x32xf32>
    %90 = arith.addf %89, %88 : vector<8x32xf32>
    %91 = arith.divf %89, %90 : vector<8x32xf32>
    %92 = arith.mulf %83, %65 : vector<8x32xf32>
    %93 = arith.mulf %77, %85 : vector<8x32xf32>
    %94 = arith.addf %92, %93 : vector<8x32xf32>
    %95 = math.tanh %94 : vector<8x32xf32>
    %96 = arith.mulf %91, %95 : vector<8x32xf32>
    %97 = arith.truncf %96 : vector<8x32xf32> to vector<8x32xbf16>
    %cst_21 = arith.constant dense<0.000000e+00> : vector<8x128xf32>
    %98 = tpu.matmul %97, %7, %cst_21 {dimension_numbers = #tpu.dot_dimension_numbers<[1], [0], [0], [1], [0, 0, 1, 1], [], []>} : vector<8x32xbf16>, vector<32x128xbf16>, vector<8x128xf32> -> vector<8x128xf32>
    %99 = vector.extract_strided_slice %6 {offsets = [24, 0], sizes = [8, 128], strides = [1, 1]} : vector<32x128xf32> to vector<8x128xf32>
    %100 = arith.addf %98, %99 : vector<8x128xf32>
    %101 = vector.extract_strided_slice %100 {offsets = [0, 0], sizes = [8, 32], strides = [1, 1]} : vector<8x128xf32> to vector<8x32xf32>
    %102 = arith.negf %101 : vector<8x32xf32>
    %103 = math.exp %102 : vector<8x32xf32>
    %cst_22 = arith.constant 1.000000e+00 : f32
    %104 = vector.broadcast %cst_22 : f32 to vector<8x32xf32>
    %105 = arith.addf %104, %103 : vector<8x32xf32>
    %106 = arith.divf %104, %105 : vector<8x32xf32>
    %107 = vector.extract_strided_slice %100 {offsets = [0, 32], sizes = [8, 32], strides = [1, 1]} : vector<8x128xf32> to vector<8x32xf32>
    %108 = arith.negf %107 : vector<8x32xf32>
    %109 = math.exp %108 : vector<8x32xf32>
    %cst_23 = arith.constant 1.000000e+00 : f32
    %110 = vector.broadcast %cst_23 : f32 to vector<8x32xf32>
    %111 = arith.addf %110, %109 : vector<8x32xf32>
    %112 = arith.divf %110, %111 : vector<8x32xf32>
    %113 = vector.extract_strided_slice %100 {offsets = [0, 64], sizes = [8, 32], strides = [1, 1]} : vector<8x128xf32> to vector<8x32xf32>
    %114 = math.tanh %113 : vector<8x32xf32>
    %115 = vector.extract_strided_slice %100 {offsets = [0, 96], sizes = [8, 32], strides = [1, 1]} : vector<8x128xf32> to vector<8x32xf32>
    %116 = arith.negf %115 : vector<8x32xf32>
    %117 = math.exp %116 : vector<8x32xf32>
    %cst_24 = arith.constant 1.000000e+00 : f32
    %118 = vector.broadcast %cst_24 : f32 to vector<8x32xf32>
    %119 = arith.addf %118, %117 : vector<8x32xf32>
    %120 = arith.divf %118, %119 : vector<8x32xf32>
    %121 = arith.mulf %112, %94 : vector<8x32xf32>
    %122 = arith.mulf %106, %114 : vector<8x32xf32>
    %123 = arith.addf %121, %122 : vector<8x32xf32>
    %124 = math.tanh %123 : vector<8x32xf32>
    %125 = arith.mulf %120, %124 : vector<8x32xf32>
    %126 = tpu.concatenate %38, %67, %96, %125 in 0 : vector<8x32xf32>, vector<8x32xf32>, vector<8x32xf32>, vector<8x32xf32> -> vector<32x32xf32>
    %127 = arith.truncf %126 : vector<32x32xf32> to vector<32x32xbf16>
    %c0_25 = arith.constant 0 : index
    %c0_26 = arith.constant 0 : index
    %128 = vector.load %arg4[%c0_25, %c0_26] : memref<32x96xbf16, #tpu.memory_space<vmem>>, vector<32x96xbf16>
    %cst_27 = arith.constant dense<0.000000e+00> : vector<32x96xf32>
    %129 = tpu.matmul %127, %128, %cst_27 {dimension_numbers = #tpu.dot_dimension_numbers<[1], [0], [0], [1], [0, 0, 1, 1], [], []>} : vector<32x32xbf16>, vector<32x96xbf16>, vector<32x96xf32> -> vector<32x96xf32>
    %c0_28 = arith.constant 0 : index
    %c0_29 = arith.constant 0 : index
    %130 = vector.load %arg5[%c0_28, %c0_29] : memref<1x96xf32, #tpu.memory_space<vmem>>, vector<1x96xf32>
    %131 = vector.broadcast %130 : vector<1x96xf32> to vector<32x96xf32>
    %132 = arith.addf %129, %131 : vector<32x96xf32>
    %133 = vector.extract_strided_slice %132 {offsets = [0, 0], sizes = [32, 8], strides = [1, 1]} : vector<32x96xf32> to vector<32x8xf32>
    %134 = arith.truncf %133 : vector<32x8xf32> to vector<32x8xbf16>
    %135 = vector.extract_strided_slice %132 {offsets = [0, 32], sizes = [32, 8], strides = [1, 1]} : vector<32x96xf32> to vector<32x8xf32>
    %136 = arith.truncf %135 : vector<32x8xf32> to vector<32x8xbf16>
    %cst_30 = arith.constant dense<0.000000e+00> : vector<32x32xf32>
    %137 = tpu.matmul %134, %136, %cst_30 {dimension_numbers = #tpu.dot_dimension_numbers<[1], [1], [0], [0], [0, 0, 1, 0], [], []>} : vector<32x8xbf16>, vector<32x8xbf16>, vector<32x32xf32> -> vector<32x32xf32>
    %138 = vector.extract_strided_slice %132 {offsets = [0, 8], sizes = [32, 8], strides = [1, 1]} : vector<32x96xf32> to vector<32x8xf32>
    %139 = arith.truncf %138 : vector<32x8xf32> to vector<32x8xbf16>
    %140 = vector.extract_strided_slice %132 {offsets = [0, 40], sizes = [32, 8], strides = [1, 1]} : vector<32x96xf32> to vector<32x8xf32>
    %141 = arith.truncf %140 : vector<32x8xf32> to vector<32x8xbf16>
    %cst_31 = arith.constant dense<0.000000e+00> : vector<32x32xf32>
    %142 = tpu.matmul %139, %141, %cst_31 {dimension_numbers = #tpu.dot_dimension_numbers<[1], [1], [0], [0], [0, 0, 1, 0], [], []>} : vector<32x8xbf16>, vector<32x8xbf16>, vector<32x32xf32> -> vector<32x32xf32>
    %143 = vector.extract_strided_slice %132 {offsets = [0, 16], sizes = [32, 8], strides = [1, 1]} : vector<32x96xf32> to vector<32x8xf32>
    %144 = arith.truncf %143 : vector<32x8xf32> to vector<32x8xbf16>
    %145 = vector.extract_strided_slice %132 {offsets = [0, 48], sizes = [32, 8], strides = [1, 1]} : vector<32x96xf32> to vector<32x8xf32>
    %146 = arith.truncf %145 : vector<32x8xf32> to vector<32x8xbf16>
    %cst_32 = arith.constant dense<0.000000e+00> : vector<32x32xf32>
    %147 = tpu.matmul %144, %146, %cst_32 {dimension_numbers = #tpu.dot_dimension_numbers<[1], [1], [0], [0], [0, 0, 1, 0], [], []>} : vector<32x8xbf16>, vector<32x8xbf16>, vector<32x32xf32> -> vector<32x32xf32>
    %148 = vector.extract_strided_slice %132 {offsets = [0, 24], sizes = [32, 8], strides = [1, 1]} : vector<32x96xf32> to vector<32x8xf32>
    %149 = arith.truncf %148 : vector<32x8xf32> to vector<32x8xbf16>
    %150 = vector.extract_strided_slice %132 {offsets = [0, 56], sizes = [32, 8], strides = [1, 1]} : vector<32x96xf32> to vector<32x8xf32>
    %151 = arith.truncf %150 : vector<32x8xf32> to vector<32x8xbf16>
    %cst_33 = arith.constant dense<0.000000e+00> : vector<32x32xf32>
    %152 = tpu.matmul %149, %151, %cst_33 {dimension_numbers = #tpu.dot_dimension_numbers<[1], [1], [0], [0], [0, 0, 1, 0], [], []>} : vector<32x8xbf16>, vector<32x8xbf16>, vector<32x32xf32> -> vector<32x32xf32>
    %153 = tpu.concatenate %137, %142, %147, %152 in 0 : vector<32x32xf32>, vector<32x32xf32>, vector<32x32xf32>, vector<32x32xf32> -> vector<128x32xf32>
    %cst_34 = arith.constant 0.353553385 : f32
    %154 = vector.broadcast %cst_34 : f32 to vector<128x32xf32>
    %155 = arith.mulf %153, %154 : vector<128x32xf32>
    %156 = tpu.iota {dimensions = array<i32: 0>} : vector<128x32xi32>
    %157 = tpu.iota {dimensions = array<i32: 1>} : vector<128x32xi32>
    %c8_i32 = arith.constant 8 : i32
    %c0_i32 = arith.constant 0 : i32
    %158 = arith.cmpi eq, %c8_i32, %c0_i32 : i32
    %c1_i32 = arith.constant 1 : i32
    %159 = arith.select %158, %c1_i32, %c8_i32 : i32
    %160 = vector.broadcast %159 : i32 to vector<128x32xi32>
    %161 = arith.remsi %156, %160 : vector<128x32xi32>
    %c0_i32_35 = arith.constant 0 : i32
    %162 = vector.broadcast %c0_i32_35 : i32 to vector<128x32xi32>
    %163 = arith.cmpi ne, %161, %162 : vector<128x32xi32>
    %c0_i32_36 = arith.constant 0 : i32
    %164 = vector.broadcast %c0_i32_36 : i32 to vector<128x32xi32>
    %165 = arith.cmpi slt, %161, %164 : vector<128x32xi32>
    %c0_i32_37 = arith.constant 0 : i32
    %166 = arith.cmpi slt, %159, %c0_i32_37 : i32
    %167 = vector.broadcast %166 : i1 to vector<128x32xi1>
    %168 = vector.broadcast %167 : vector<128x32xi1> to vector<128x32xi1>
    %169 = arith.xori %165, %168 : vector<128x32xi1>
    %170 = arith.andi %169, %163 : vector<128x32xi1>
    %171 = vector.broadcast %159 : i32 to vector<128x32xi32>
    %172 = arith.addi %161, %171 : vector<128x32xi32>
    %173 = arith.select %170, %172, %161 : vector<128x32xi1>, vector<128x32xi32>
    %c8_i32_38 = arith.constant 8 : i32
    %c0_i32_39 = arith.constant 0 : i32
    %174 = arith.cmpi eq, %c8_i32_38, %c0_i32_39 : i32
    %c1_i32_40 = arith.constant 1 : i32
    %175 = arith.select %174, %c1_i32_40, %c8_i32_38 : i32
    %176 = vector.broadcast %175 : i32 to vector<128x32xi32>
    %177 = arith.remsi %157, %176 : vector<128x32xi32>
    %c0_i32_41 = arith.constant 0 : i32
    %178 = vector.broadcast %c0_i32_41 : i32 to vector<128x32xi32>
    %179 = arith.cmpi ne, %177, %178 : vector<128x32xi32>
    %c0_i32_42 = arith.constant 0 : i32
    %180 = vector.broadcast %c0_i32_42 : i32 to vector<128x32xi32>
    %181 = arith.cmpi slt, %177, %180 : vector<128x32xi32>
    %c0_i32_43 = arith.constant 0 : i32
    %182 = arith.cmpi slt, %175, %c0_i32_43 : i32
    %183 = vector.broadcast %182 : i1 to vector<128x32xi1>
    %184 = vector.broadcast %183 : vector<128x32xi1> to vector<128x32xi1>
    %185 = arith.xori %181, %184 : vector<128x32xi1>
    %186 = arith.andi %185, %179 : vector<128x32xi1>
    %187 = vector.broadcast %175 : i32 to vector<128x32xi32>
    %188 = arith.addi %177, %187 : vector<128x32xi32>
    %189 = arith.select %186, %188, %177 : vector<128x32xi1>, vector<128x32xi32>
    %190 = arith.cmpi eq, %173, %189 : vector<128x32xi32>
    %cst_44 = arith.constant -1.000000e+30 : f32
    %191 = vector.broadcast %cst_44 : f32 to vector<128x32xf32>
    %192 = arith.select %190, %155, %191 : vector<128x32xi1>, vector<128x32xf32>
    %cst_45 = arith.constant dense<0xFF800000> : vector<128xf32>
    %193 = vector.multi_reduction <maximumf>, %192, %cst_45 [1] : vector<128x32xf32> to vector<128xf32>
    %194 = vector.shape_cast %193 : vector<128xf32> to vector<128x1xf32>
    %195 = vector.broadcast %194 : vector<128x1xf32> to vector<128x32xf32>
    %196 = arith.subf %192, %195 : vector<128x32xf32>
    %197 = math.exp %196 : vector<128x32xf32>
    %cst_46 = arith.constant dense<0.000000e+00> : vector<128xf32>
    %198 = vector.multi_reduction <add>, %197, %cst_46 [1] : vector<128x32xf32> to vector<128xf32>
    %199 = vector.shape_cast %198 : vector<128xf32> to vector<128x1xf32>
    %200 = tpu.reciprocal %199 {approx = true} : vector<128x1xf32> -> vector<128x1xf32>
    %201 = vector.broadcast %200 : vector<128x1xf32> to vector<128x32xf32>
    %202 = arith.mulf %197, %201 : vector<128x32xf32>
    %203 = arith.truncf %202 : vector<128x32xf32> to vector<128x32xbf16>
    %c0_47 = arith.constant 0 : index
    %c0_48 = arith.constant 0 : index
    %204 = vector.load %arg6[%c0_47, %c0_48] : memref<32x128xbf16, #tpu.memory_space<vmem>>, vector<32x128xbf16>
    %cst_49 = arith.constant dense<0.000000e+00> : vector<32x128xf32>
    %205 = tpu.matmul %127, %204, %cst_49 {dimension_numbers = #tpu.dot_dimension_numbers<[1], [0], [0], [1], [0, 0, 1, 1], [], []>} : vector<32x32xbf16>, vector<32x128xbf16>, vector<32x128xf32> -> vector<32x128xf32>
    %c0_50 = arith.constant 0 : index
    %c0_51 = arith.constant 0 : index
    %206 = vector.load %arg8[%c0_50, %c0_51] : memref<1x128xf32, #tpu.memory_space<vmem>>, vector<1x128xf32>
    %207 = vector.broadcast %206 : vector<1x128xf32> to vector<32x128xf32>
    %208 = arith.addf %205, %207 : vector<32x128xf32>
    %209 = vector.extract_strided_slice %132 {offsets = [0, 64], sizes = [32, 8], strides = [1, 1]} : vector<32x96xf32> to vector<32x8xf32>
    %210 = arith.truncf %209 : vector<32x8xf32> to vector<32x8xbf16>
    %211 = vector.extract_strided_slice %203 {offsets = [0, 0], sizes = [32, 32], strides = [1, 1]} : vector<128x32xbf16> to vector<32x32xbf16>
    %cst_52 = arith.constant dense<0.000000e+00> : vector<32x8xf32>
    %212 = tpu.matmul %211, %210, %cst_52 {dimension_numbers = #tpu.dot_dimension_numbers<[1], [0], [0], [1], [0, 0, 1, 1], [], []>} : vector<32x32xbf16>, vector<32x8xbf16>, vector<32x8xf32> -> vector<32x8xf32>
    %213 = arith.truncf %212 : vector<32x8xf32> to vector<32x8xbf16>
    %c0_53 = arith.constant 0 : index
    %c0_54 = arith.constant 0 : index
    %214 = vector.load %arg7[%c0_53, %c0_54] : memref<32x128xbf16, #tpu.memory_space<vmem>>, vector<8x128xbf16>
    %cst_55 = arith.constant dense<0.000000e+00> : vector<32x128xf32>
    %215 = tpu.matmul %213, %214, %cst_55 {dimension_numbers = #tpu.dot_dimension_numbers<[1], [0], [0], [1], [0, 0, 1, 1], [], []>} : vector<32x8xbf16>, vector<8x128xbf16>, vector<32x128xf32> -> vector<32x128xf32>
    %216 = arith.addf %208, %215 : vector<32x128xf32>
    %217 = vector.extract_strided_slice %132 {offsets = [0, 72], sizes = [32, 8], strides = [1, 1]} : vector<32x96xf32> to vector<32x8xf32>
    %218 = arith.truncf %217 : vector<32x8xf32> to vector<32x8xbf16>
    %219 = vector.extract_strided_slice %203 {offsets = [32, 0], sizes = [32, 32], strides = [1, 1]} : vector<128x32xbf16> to vector<32x32xbf16>
    %cst_56 = arith.constant dense<0.000000e+00> : vector<32x8xf32>
    %220 = tpu.matmul %219, %218, %cst_56 {dimension_numbers = #tpu.dot_dimension_numbers<[1], [0], [0], [1], [0, 0, 1, 1], [], []>} : vector<32x32xbf16>, vector<32x8xbf16>, vector<32x8xf32> -> vector<32x8xf32>
    %221 = arith.truncf %220 : vector<32x8xf32> to vector<32x8xbf16>
    %c8 = arith.constant 8 : index
    %c0_57 = arith.constant 0 : index
    %222 = vector.load %arg7[%c8, %c0_57] : memref<32x128xbf16, #tpu.memory_space<vmem>>, vector<8x128xbf16>
    %cst_58 = arith.constant dense<0.000000e+00> : vector<32x128xf32>
    %223 = tpu.matmul %221, %222, %cst_58 {dimension_numbers = #tpu.dot_dimension_numbers<[1], [0], [0], [1], [0, 0, 1, 1], [], []>} : vector<32x8xbf16>, vector<8x128xbf16>, vector<32x128xf32> -> vector<32x128xf32>
    %224 = arith.addf %216, %223 : vector<32x128xf32>
    %225 = vector.extract_strided_slice %132 {offsets = [0, 80], sizes = [32, 8], strides = [1, 1]} : vector<32x96xf32> to vector<32x8xf32>
    %226 = arith.truncf %225 : vector<32x8xf32> to vector<32x8xbf16>
    %227 = vector.extract_strided_slice %203 {offsets = [64, 0], sizes = [32, 32], strides = [1, 1]} : vector<128x32xbf16> to vector<32x32xbf16>
    %cst_59 = arith.constant dense<0.000000e+00> : vector<32x8xf32>
    %228 = tpu.matmul %227, %226, %cst_59 {dimension_numbers = #tpu.dot_dimension_numbers<[1], [0], [0], [1], [0, 0, 1, 1], [], []>} : vector<32x32xbf16>, vector<32x8xbf16>, vector<32x8xf32> -> vector<32x8xf32>
    %229 = arith.truncf %228 : vector<32x8xf32> to vector<32x8xbf16>
    %c16 = arith.constant 16 : index
    %c0_60 = arith.constant 0 : index
    %230 = vector.load %arg7[%c16, %c0_60] : memref<32x128xbf16, #tpu.memory_space<vmem>>, vector<8x128xbf16>
    %cst_61 = arith.constant dense<0.000000e+00> : vector<32x128xf32>
    %231 = tpu.matmul %229, %230, %cst_61 {dimension_numbers = #tpu.dot_dimension_numbers<[1], [0], [0], [1], [0, 0, 1, 1], [], []>} : vector<32x8xbf16>, vector<8x128xbf16>, vector<32x128xf32> -> vector<32x128xf32>
    %232 = arith.addf %224, %231 : vector<32x128xf32>
    %233 = vector.extract_strided_slice %132 {offsets = [0, 88], sizes = [32, 8], strides = [1, 1]} : vector<32x96xf32> to vector<32x8xf32>
    %234 = arith.truncf %233 : vector<32x8xf32> to vector<32x8xbf16>
    %235 = vector.extract_strided_slice %203 {offsets = [96, 0], sizes = [32, 32], strides = [1, 1]} : vector<128x32xbf16> to vector<32x32xbf16>
    %cst_62 = arith.constant dense<0.000000e+00> : vector<32x8xf32>
    %236 = tpu.matmul %235, %234, %cst_62 {dimension_numbers = #tpu.dot_dimension_numbers<[1], [0], [0], [1], [0, 0, 1, 1], [], []>} : vector<32x32xbf16>, vector<32x8xbf16>, vector<32x8xf32> -> vector<32x8xf32>
    %237 = arith.truncf %236 : vector<32x8xf32> to vector<32x8xbf16>
    %c24 = arith.constant 24 : index
    %c0_63 = arith.constant 0 : index
    %238 = vector.load %arg7[%c24, %c0_63] : memref<32x128xbf16, #tpu.memory_space<vmem>>, vector<8x128xbf16>
    %cst_64 = arith.constant dense<0.000000e+00> : vector<32x128xf32>
    %239 = tpu.matmul %237, %238, %cst_64 {dimension_numbers = #tpu.dot_dimension_numbers<[1], [0], [0], [1], [0, 0, 1, 1], [], []>} : vector<32x8xbf16>, vector<8x128xbf16>, vector<32x128xf32> -> vector<32x128xf32>
    %240 = arith.addf %232, %239 : vector<32x128xf32>
    %cst_65 = arith.constant dense<0xFF800000> : vector<32xf32>
    %241 = vector.multi_reduction <maximumf>, %240, %cst_65 [1] : vector<32x128xf32> to vector<32xf32>
    %242 = vector.shape_cast %241 : vector<32xf32> to vector<32x1xf32>
    %243 = vector.broadcast %242 : vector<32x1xf32> to vector<32x128xf32>
    %244 = arith.subf %240, %243 : vector<32x128xf32>
    %245 = math.exp %244 : vector<32x128xf32>
    %cst_66 = arith.constant dense<0.000000e+00> : vector<32xf32>
    %246 = vector.multi_reduction <add>, %245, %cst_66 [1] : vector<32x128xf32> to vector<32xf32>
    %247 = vector.shape_cast %246 : vector<32xf32> to vector<32x1xf32>
    %248 = math.log %247 : vector<32x1xf32>
    %249 = vector.broadcast %248 : vector<32x1xf32> to vector<32x128xf32>
    %250 = arith.subf %244, %249 : vector<32x128xf32>
    %c0_67 = arith.constant 0 : index
    %c0_68 = arith.constant 0 : index
    %251 = vector.load %arg9[%c0_67, %c0_68] : memref<32x128xf32, #tpu.memory_space<vmem>>, vector<32x128xf32>
    tpu.vector_store %arg9[%c0_67, %c0_68], %250 {strides = array<i32>} : memref<32x128xf32, #tpu.memory_space<vmem>>, vector<32x128xf32>,
    return
  }
}

</mosaic_0001>

<llo_original>
// kernel: tpu_custom_call.1
$region0: #{tpu_custom_call.1}
  #allocation0 [shape = 'u32[]', space=smem, size = 0x4, offset = 0x4, fixed_abs, tag = 'smem constant byte address 0x4 - core index']
  #allocation1 [shape = 'u32[144,128]{1,0:T(1,128)}', space=vmem, size = 0x12000, scoped, tag = 'internal scratch']
  %s0 = inlined_call_operand.hbm [shape: f32[32,32], index: 0, kind: input, shape index: {}]
  %s1 = inlined_call_operand.hbm [shape: bf16[32,128], index: 1, kind: input, shape index: {}]
  %s2 = inlined_call_operand.hbm [shape: bf16[32,128], index: 2, kind: input, shape index: {}]
  %s3 = inlined_call_operand.vmem [shape: f32[1,128], index: 3, kind: input, shape index: {}]
  %s4 = inlined_call_operand.hbm [shape: bf16[32,96], index: 4, kind: input, shape index: {}]
  %s5 = inlined_call_operand.vmem [shape: f32[1,96], index: 5, kind: input, shape index: {}]
  %s6 = inlined_call_operand.hbm [shape: bf16[32,128], index: 6, kind: input, shape index: {}]
  %s7 = inlined_call_operand.hbm [shape: bf16[32,128], index: 7, kind: input, shape index: {}]
  %s8 = inlined_call_operand.vmem [shape: f32[1,128], index: 8, kind: input, shape index: {}]
  %s9 = inlined_call_operand.hbm [shape: f32[32,128], index: 9, kind: output, shape index: {}]
  %s10 = sld [smem:[#allocation0]]
  $region70: #{tpu_custom_call.1} parent=0
    _
  %s12 = ssub.s32 1, %s10
  %s13 = scalar_select 0, %s12, %s10
  $region1: #{tpu_custom_call.1} parent=0
    #allocation2 [shape = 'u8[16384]{0}', space=vmem, size = 0x4000, scoped, tag = 'input window, operand 0, single buffered']
    #allocation3 [shape = 's32[1]{0}', space=sflag, size = 0x4, scoped, tag = 'scoped memory for tpu_custom_call.1']
    #allocation4 [shape = 's32[1]{0}', space=sflag, size = 0x4, scoped, tag = 'scoped memory for tpu_custom_call.1']
    #allocation5 [shape = 'u8[8192]{0}', space=vmem, size = 0x2000, scoped, tag = 'input window, operand 1, single buffered']
    #allocation6 [shape = 's32[1]{0}', space=sflag, size = 0x4, scoped, tag = 'scoped memory for tpu_custom_call.1']
    #allocation7 [shape = 'u8[8192]{0}', space=vmem, size = 0x2000, scoped, tag = 'input window, operand 2, single buffered']
    #allocation8 [shape = 'u8[8192]{0}', space=vmem, size = 0x2000, scoped, tag = 'input window, operand 4, single buffered']
    #allocation9 [shape = 's32[1]{0}', space=sflag, size = 0x4, scoped, tag = 'scoped memory for tpu_custom_call.1']
    #allocation10 [shape = 'u8[8192]{0}', space=vmem, size = 0x2000, scoped, tag = 'input window, operand 6, single buffered']
    #allocation11 [shape = 'u8[8192]{0}', space=vmem, size = 0x2000, scoped, tag = 'input window, operand 7, single buffered']
    #allocation12 [shape = 's32[1]{0}', space=sflag, size = 0x4, scoped, tag = 'scoped memory for tpu_custom_call.1']
    #allocation13 [shape = 'u8[16384]{0}', space=vmem, size = 0x4000, scoped, tag = 'output window, operand 0, single buffered']
    %14 = vsyncpa [#allocation3], 0
    %15 = vsyncpa [#allocation6], 0
    %16 = vsyncpa [#allocation9], 0
    %17 = vsyncpa [#allocation12], 0
    %18 = vsyncpa [#allocation4], 0
    // Predicated region
    $region2: #{tpu_custom_call.1} parent=1 // pred_check
      _
    $region3: #{tpu_custom_call.1} parent=1 // pred_check_branch
      %20 = sbr.rel (0) target = $region5
    $region4: #{tpu_custom_call.1} parent=1 // pred_region
      %s22 = ssub.s32 512, 512
      %23 = vsyncadd [#allocation3], %s22
      %s24 = sshll.u32 [#allocation2], 4
      %s25 = int_to_ptr.vmem [resolvable:$true] %s24
      %30 = dma.hbm_to_vmem [thread:$0]  %s0, 512, %s25, [#allocation3], 128, 128, 8
    $region5: #{tpu_custom_call.1} parent=1 // pred_fallthru
      _
    // Predicated region
    $region6: #{tpu_custom_call.1} parent=1 // pred_check
      _
    $region7: #{tpu_custom_call.1} parent=1 // pred_check_branch
      %32 = sbr.rel (0) target = $region9
    $region8: #{tpu_custom_call.1} parent=1 // pred_region
      %s34 = ssub.s32 256, 256
      %35 = vsyncadd [#allocation6], %s34
      %s36 = sshll.u32 [#allocation5], 4
      %s37 = int_to_ptr.vmem [resolvable:$true] %s36
      %42 = dma.hbm_to_vmem [thread:$0]  %s1, 256, %s37, [#allocation6], 64, 64, 4
    $region9: #{tpu_custom_call.1} parent=1 // pred_fallthru
      _
    // Predicated region
    $region10: #{tpu_custom_call.1} parent=1 // pred_check
      _
    $region11: #{tpu_custom_call.1} parent=1 // pred_check_branch
      %44 = sbr.rel (0) target = $region13
    $region12: #{tpu_custom_call.1} parent=1 // pred_region
      %s46 = ssub.s32 256, 256
      %47 = vsyncadd [#allocation6], %s46
      %s48 = sshll.u32 [#allocation7], 4
      %s49 = int_to_ptr.vmem [resolvable:$true] %s48
      %54 = dma.hbm_to_vmem [thread:$0]  %s2, 256, %s49, [#allocation6], 64, 64, 4
    $region13: #{tpu_custom_call.1} parent=1 // pred_fallthru
      _
    // Predicated region
    $region14: #{tpu_custom_call.1} parent=1 // pred_check
      _
    $region15: #{tpu_custom_call.1} parent=1 // pred_check_branch
      %56 = sbr.rel (0) target = $region17
    $region16: #{tpu_custom_call.1} parent=1 // pred_region
      _
    $region17: #{tpu_custom_call.1} parent=1 // pred_fallthru
      _
    // Predicated region
    $region18: #{tpu_custom_call.1} parent=1 // pred_check
      _
    $region19: #{tpu_custom_call.1} parent=1 // pred_check_branch
      %58 = sbr.rel (0) target = $region21
    $region20: #{tpu_custom_call.1} parent=1 // pred_region
      %s60 = ssub.s32 256, 256
      %61 = vsyncadd [#allocation9], %s60
      %s62 = sshll.u32 [#allocation8], 4
      %s63 = int_to_ptr.vmem [resolvable:$true] %s62
      %68 = dma.hbm_to_vmem [thread:$0]  %s4, 256, %s63, [#allocation9], 64, 64, 4
    $region21: #{tpu_custom_call.1} parent=1 // pred_fallthru
      _
    // Predicated region
    $region22: #{tpu_custom_call.1} parent=1 // pred_check
      _
    $region23: #{tpu_custom_call.1} parent=1 // pred_check_branch
      %70 = sbr.rel (0) target = $region25
    $region24: #{tpu_custom_call.1} parent=1 // pred_region
      _
    $region25: #{tpu_custom_call.1} parent=1 // pred_fallthru
      _
    // Predicated region
    $region26: #{tpu_custom_call.1} parent=1 // pred_check
      _
    $region27: #{tpu_custom_call.1} parent=1 // pred_check_branch
      %72 = sbr.rel (0) target = $region29
    $region28: #{tpu_custom_call.1} parent=1 // pred_region
      %s74 = ssub.s32 256, 256
      %75 = vsyncadd [#allocation9], %s74
      %s76 = sshll.u32 [#allocation10], 4
      %s77 = int_to_ptr.vmem [resolvable:$true] %s76
      %82 = dma.hbm_to_vmem [thread:$0]  %s6, 256, %s77, [#allocation9], 64, 64, 4
    $region29: #{tpu_custom_call.1} parent=1 // pred_fallthru
      _
    // Predicated region
    $region30: #{tpu_custom_call.1} parent=1 // pred_check
      _
    $region31: #{tpu_custom_call.1} parent=1 // pred_check_branch
      %84 = sbr.rel (0) target = $region33
    $region32: #{tpu_custom_call.1} parent=1 // pred_region
      %s86 = ssub.s32 256, 256
      %87 = vsyncadd [#allocation12], %s86
      %s88 = sshll.u32 [#allocation11], 4
      %s89 = int_to_ptr.vmem [resolvable:$true] %s88
      %94 = dma.hbm_to_vmem [thread:$0]  %s7, 256, %s89, [#allocation12], 64, 64, 4
    $region33: #{tpu_custom_call.1} parent=1 // pred_fallthru
      _
    // Predicated region
    $region34: #{tpu_custom_call.1} parent=1 // pred_check
      _
    $region35: #{tpu_custom_call.1} parent=1 // pred_check_branch
      %96 = sbr.rel (0) target = $region37
    $region36: #{tpu_custom_call.1} parent=1 // pred_region
      _
    $region37: #{tpu_custom_call.1} parent=1 // pred_fallthru
      _
    // Predicated region
    $region38: #{tpu_custom_call.1} parent=1 // pred_check
      _
    $region39: #{tpu_custom_call.1} parent=1 // pred_check_branch
      %98 = sbr.rel (0) target = $region41
    $region40: #{tpu_custom_call.1} parent=1 // pred_region
      %99 = dma.done [#allocation3], 512
    $region41: #{tpu_custom_call.1} parent=1 // pred_fallthru
      _
    // Predicated region
    $region42: #{tpu_custom_call.1} parent=1 // pred_check
      _
    $region43: #{tpu_custom_call.1} parent=1 // pred_check_branch
      %101 = sbr.rel (0) target = $region45
    $region44: #{tpu_custom_call.1} parent=1 // pred_region
      %102 = dma.done [#allocation6], 256
    $region45: #{tpu_custom_call.1} parent=1 // pred_fallthru
      _
    // Predicated region
    $region46: #{tpu_custom_call.1} parent=1 // pred_check
      _
    $region47: #{tpu_custom_call.1} parent=1 // pred_check_branch
      %104 = sbr.rel (0) target = $region49
    $region48: #{tpu_custom_call.1} parent=1 // pred_region
      %105 = dma.done [#allocation6], 256
    $region49: #{tpu_custom_call.1} parent=1 // pred_fallthru
      _
    // Predicated region
    $region50: #{tpu_custom_call.1} parent=1 // pred_check
      _
    $region51: #{tpu_custom_call.1} parent=1 // pred_check_branch
      %107 = sbr.rel (0) target = $region53
    $region52: #{tpu_custom_call.1} parent=1 // pred_region
      %108 = dma.done [#allocation9], 256
    $region53: #{tpu_custom_call.1} parent=1 // pred_fallthru
      _
    // Predicated region
    $region54: #{tpu_custom_call.1} parent=1 // pred_check
      _
    $region55: #{tpu_custom_call.1} parent=1 // pred_check_branch
      %110 = sbr.rel (0) target = $region57
    $region56: #{tpu_custom_call.1} parent=1 // pred_region
      %111 = dma.done [#allocation9], 256
    $region57: #{tpu_custom_call.1} parent=1 // pred_fallthru
      _
    // Predicated region
    $region58: #{tpu_custom_call.1} parent=1 // pred_check
      _
    $region59: #{tpu_custom_call.1} parent=1 // pred_check_branch
      %113 = sbr.rel (0) target = $region61
    $region60: #{tpu_custom_call.1} parent=1 // pred_region
      %114 = dma.done [#allocation12], 256
    $region61: #{tpu_custom_call.1} parent=1 // pred_fallthru
      _
    %v116 = vld [vmem:[#allocation2] sm:$0xff]
    %v117 = vld [vmem:[#allocation2 + $0x8] sm:$0xff]
    %v118 = vld [vmem:[#allocation2 + $0x10] sm:$0xff]
    %v119 = vld [vmem:[#allocation2 + $0x18] sm:$0xff]
    %v120 = vpack.c.bf16 %v117, %v116
    %v121 = vpack.c.bf16 %v119, %v118
    %v122 = vld [vmem:[#allocation5] sm:$0xf]
    %v123 = vld [vmem:[#allocation5 + $0x4] sm:$0xf]
    %v124 = vld [vmem:[#allocation5 + $0x8] sm:$0xf]
    %v125 = vld [vmem:[#allocation5 + $0xc] sm:$0xf]
    %v126 = vld [vmem:[%s3] sm:$0x1]
    %v128 = vlaneseq
    %v129 = vshrl.u32 %v128, 7
    %v130 = vsub.s32 0, %v129
    %v131 = vrot.slane %v126, %v130
    %v137 = vunpack.c.l.b16 %v122
    %v138 = vunpack.c.l.b16 %v123
    %v139 = vunpack.c.l.b16 %v124
    %v140 = vunpack.c.l.b16 %v125
    %v141 = vpack.c.b16 %v138, %v137
    %v142 = vpack.c.b16 %v140, %v139
    %vm145 = vcmask 261120
    %v147 = vsel %vm145, %v120, 0
    %v150 = vsel %vm145, %v121, 0
    %152 = vmatprep.subr.bf16.mxu0 0
    %153 = vmatpush1.bf16.msra.mxu0 0
    %154 = vmatprep.subr.bf16.mxu0 0
    %155 = vmatpush1.bf16.msra.mxu0 0
    %156 = vmatprep.subr.bf16.mxu0 0
    %157 = vmatpush1.bf16.msra.mxu0 0
    %158 = vmatprep.subr.bf16.mxu0 0
    %159 = vmatpush1.bf16.msra.mxu0 0
    %160 = vmatprep.subr.bf16.mxu0 0
    %161 = vmatpush1.bf16.msra.mxu0 0
    %162 = vmatprep.subr.bf16.mxu0 0
    %163 = vmatpush1.bf16.msra.mxu0 0
    %164 = vmatprep.subr.bf16.mxu0 0
    %165 = vmatpush1.bf16.msra.mxu0 %v142
    %166 = vmatprep.subr.bf16.mxu0 0
    %167 = vmatpush1.bf16.msra.mxu0 %v141
    %168 = vmatprep.subr.bf16.mxu0 0
    %169 = vmatpush2.bf16.msra.mxu0 0
    %170 = vmatprep.subr.bf16.mxu0 0
    %171 = vmatpush2.bf16.msra.mxu0 0
    %172 = vmatprep.subr.bf16.mxu0 0
    %173 = vmatpush2.bf16.msra.mxu0 0
    %174 = vmatprep.subr.bf16.mxu0 0
    %175 = vmatpush2.bf16.msra.mxu0 0
    %176 = vmatprep.subr.bf16.mxu0 0
    %177 = vmatpush2.bf16.msra.mxu0 0
    %178 = vmatprep.subr.bf16.mxu0 0
    %179 = vmatpush2.bf16.msra.mxu0 0
    %180 = vmatprep.subr.bf16.mxu0 0
    %181 = vmatpush2.bf16.msra.mxu0 0
    %182 = vmatprep.subr.bf16.mxu0 0
    %183 = vmatpush2.bf16.msra.mxu0 0
    %184 = vmatprep.mubr.bf16.mxu0 0
    %185 = vmatmul.mubr.bf16.gmra.mxu0 %v147
    %v186 = vpop.f32.mrf.mxu0
    %v187 = vadd.f32 %v131, %v186
    %v188 = vpop.f32.mrf.mxu0
    %v189 = vpop.f32.mrf.mxu0
    %v190 = vadd.f32 %v131, %v189
    %v191 = vpop.f32.mrf.mxu0
    %192 = vmatprep.mubr.bf16.mxu0 0
    %193 = vmatmul.mubr.bf16.gmra.mxu0 %v150
    %v194 = vpop.f32.mrf.mxu0
    %v195 = vadd.f32 %v131, %v194
    %v196 = vpop.f32.mrf.mxu0
    %v197 = vpop.f32.mrf.mxu0
    %v198 = vadd.f32 %v131, %v197
    %v199 = vpop.f32.mrf.mxu0
    %200 = vdwg.mxu0
    %v201 = vld [vmem:[#allocation7] sm:$0xf]
    %v202 = vld [vmem:[#allocation7 + $0x4] sm:$0xf]
    %v203 = vld [vmem:[#allocation7 + $0x8] sm:$0xf]
    %v204 = vld [vmem:[#allocation7 + $0xc] sm:$0xf]
    %v209 = vunpack.c.l.b16 %v201
    %v210 = vunpack.c.l.b16 %v202
    %v211 = vunpack.c.l.b16 %v203
    %v212 = vunpack.c.l.b16 %v204
    %v213 = vpack.c.b16 %v210, %v209
    %v214 = vpack.c.b16 %v212, %v211
    %v218 = vsel %vm145, 0, 0
    %220 = vmatprep.subr.bf16.mxu0 0
    %221 = vmatpush1.bf16.msra.mxu0 0
    %222 = vmatprep.subr.bf16.mxu0 0
    %223 = vmatpush1.bf16.msra.mxu0 0
    %224 = vmatprep.subr.bf16.mxu0 0
    %225 = vmatpush1.bf16.msra.mxu0 0
    %226 = vmatprep.subr.bf16.mxu0 0
    %227 = vmatpush1.bf16.msra.mxu0 0
    %228 = vmatprep.subr.bf16.mxu0 0
    %229 = vmatpush1.bf16.msra.mxu0 0
    %230 = vmatprep.subr.bf16.mxu0 0
    %231 = vmatpush1.bf16.msra.mxu0 0
    %232 = vmatprep.subr.bf16.mxu0 0
    %233 = vmatpush1.bf16.msra.mxu0 %v214
    %234 = vmatprep.subr.bf16.mxu0 0
    %235 = vmatpush1.bf16.msra.mxu0 %v213
    %236 = vmatprep.subr.bf16.mxu0 0
    %237 = vmatpush2.bf16.msra.mxu0 0
    %238 = vmatprep.subr.bf16.mxu0 0
    %239 = vmatpush2.bf16.msra.mxu0 0
    %240 = vmatprep.subr.bf16.mxu0 0
    %241 = vmatpush2.bf16.msra.mxu0 0
    %242 = vmatprep.subr.bf16.mxu0 0
    %243 = vmatpush2.bf16.msra.mxu0 0
    %244 = vmatprep.subr.bf16.mxu0 0
    %245 = vmatpush2.bf16.msra.mxu0 0
    %246 = vmatprep.subr.bf16.mxu0 0
    %247 = vmatpush2.bf16.msra.mxu0 0
    %248 = vmatprep.subr.bf16.mxu0 0
    %249 = vmatpush2.bf16.msra.mxu0 0
    %250 = vmatprep.subr.bf16.mxu0 0
    %251 = vmatpush2.bf16.msra.mxu0 0
    %252 = vmatprep.mubr.bf16.mxu0 0
    %253 = vmatmul.mubr.bf16.gmra.mxu0 %v218
    %v254 = vpop.f32.mrf.mxu0
    %v255 = vadd.f32 %v187, %v254
    %v256 = vpop.f32.mrf.mxu0
    %v257 = vpop.f32.mrf.mxu0
    %v258 = vpop.f32.mrf.mxu0
    %259 = vdwg.mxu0
    %v260 = vxor.u32 %v255, 2147483648
    %v261 = vmul.f32 %v260, 1.442695
    %v262 = vpow.pop %v261
    %v263 = vadd.f32 %v262, 1.0
    %v264 = vrcp.pop %v263
    %v265 = vmul.f32 1.0, %v264
    %v266 = vtanh.pop %v255
    %v267 = vmul.f32 %v265, 0.0
    %269 = vrot.lane.b32.xlu0 %v266, 64
    %v270 = vpop.permute.xlu0 %269
    %v272 = vmul.f32 %v265, %v270
    %274 = vrot.lane.b32.xlu0 %v272, 32
    %v275 = vpop.permute.xlu0 %274
    %v277 = vadd.f32 %v267, %v275
    %v278 = vtanh.pop %v277
    %280 = vrot.lane.b32.xlu0 %v278, 64
    %v281 = vpop.permute.xlu0 %280
    %v283 = vmul.f32 %v265, %v281
    %v284 = vpack.c.bf16 %v283, %v283
    %286 = vrot.lane.b32.xlu0 %v284, 32
    %v287 = vpop.permute.xlu0 %286
    %v289 = vsel %vm145, %v287, 0
    %291 = vmatprep.subr.bf16.mxu0 0
    %292 = vmatpush1.bf16.msra.mxu0 0
    %293 = vmatprep.subr.bf16.mxu0 0
    %294 = vmatpush1.bf16.msra.mxu0 0
    %295 = vmatprep.subr.bf16.mxu0 0
    %296 = vmatpush1.bf16.msra.mxu0 0
    %297 = vmatprep.subr.bf16.mxu0 0
    %298 = vmatpush1.bf16.msra.mxu0 0
    %299 = vmatprep.subr.bf16.mxu0 0
    %300 = vmatpush1.bf16.msra.mxu0 0
    %301 = vmatprep.subr.bf16.mxu0 0
    %302 = vmatpush1.bf16.msra.mxu0 0
    %303 = vmatprep.subr.bf16.mxu0 0
    %304 = vmatpush1.bf16.msra.mxu0 %v214
    %305 = vmatprep.subr.bf16.mxu0 0
    %306 = vmatpush1.bf16.msra.mxu0 %v213
    %307 = vmatprep.subr.bf16.mxu0 0
    %308 = vmatpush2.bf16.msra.mxu0 0
    %309 = vmatprep.subr.bf16.mxu0 0
    %310 = vmatpush2.bf16.msra.mxu0 0
    %311 = vmatprep.subr.bf16.mxu0 0
    %312 = vmatpush2.bf16.msra.mxu0 0
    %313 = vmatprep.subr.bf16.mxu0 0
    %314 = vmatpush2.bf16.msra.mxu0 0
    %315 = vmatprep.subr.bf16.mxu0 0
    %316 = vmatpush2.bf16.msra.mxu0 0
    %317 = vmatprep.subr.bf16.mxu0 0
    %318 = vmatpush2.bf16.msra.mxu0 0
    %319 = vmatprep.subr.bf16.mxu0 0
    %320 = vmatpush2.bf16.msra.mxu0 0
    %321 = vmatprep.subr.bf16.mxu0 0
    %322 = vmatpush2.bf16.msra.mxu0 0
    %323 = vmatprep.mubr.bf16.mxu0 0
    %324 = vmatmul.mubr.bf16.gmra.mxu0 %v289
    %v325 = vpop.f32.mrf.mxu0
    %v326 = vadd.f32 %v190, %v325
    %v327 = vpop.f32.mrf.mxu0
    %v328 = vpop.f32.mrf.mxu0
    %v329 = vpop.f32.mrf.mxu0
    %330 = vdwg.mxu0
    %v331 = vxor.u32 %v326, 2147483648
    %v332 = vmul.f32 %v331, 1.442695
    %v333 = vpow.pop %v332
    %v334 = vadd.f32 %v333, 1.0
    %v335 = vrcp.pop %v334
    %v336 = vmul.f32 1.0, %v335
    %v337 = vtanh.pop %v326
    %v338 = vmul.f32 %v336, %v277
    %340 = vrot.lane.b32.xlu0 %v337, 64
    %v341 = vpop.permute.xlu0 %340
    %v343 = vmul.f32 %v336, %v341
    %345 = vrot.lane.b32.xlu0 %v343, 32
    %v346 = vpop.permute.xlu0 %345
    %v348 = vadd.f32 %v338, %v346
    %v349 = vtanh.pop %v348
    %351 = vrot.lane.b32.xlu0 %v349, 64
    %v352 = vpop.permute.xlu0 %351
    %v354 = vmul.f32 %v336, %v352
    %v355 = vpack.c.bf16 %v354, %v354
    %357 = vrot.lane.b32.xlu0 %v355, 32
    %v358 = vpop.permute.xlu0 %357
    %v360 = vsel %vm145, %v358, 0
    %362 = vmatprep.subr.bf16.mxu0 0
    %363 = vmatpush1.bf16.msra.mxu0 0
    %364 = vmatprep.subr.bf16.mxu0 0
    %365 = vmatpush1.bf16.msra.mxu0 0
    %366 = vmatprep.subr.bf16.mxu0 0
    %367 = vmatpush1.bf16.msra.mxu0 0
    %368 = vmatprep.subr.bf16.mxu0 0
    %369 = vmatpush1.bf16.msra.mxu0 0
    %370 = vmatprep.subr.bf16.mxu0 0
    %371 = vmatpush1.bf16.msra.mxu0 0
    %372 = vmatprep.subr.bf16.mxu0 0
    %373 = vmatpush1.bf16.msra.mxu0 0
    %374 = vmatprep.subr.bf16.mxu0 0
    %375 = vmatpush1.bf16.msra.mxu0 %v214
    %376 = vmatprep.subr.bf16.mxu0 0
    %377 = vmatpush1.bf16.msra.mxu0 %v213
    %378 = vmatprep.subr.bf16.mxu0 0
    %379 = vmatpush2.bf16.msra.mxu0 0
    %380 = vmatprep.subr.bf16.mxu0 0
    %381 = vmatpush2.bf16.msra.mxu0 0
    %382 = vmatprep.subr.bf16.mxu0 0
    %383 = vmatpush2.bf16.msra.mxu0 0
    %384 = vmatprep.subr.bf16.mxu0 0
    %385 = vmatpush2.bf16.msra.mxu0 0
    %386 = vmatprep.subr.bf16.mxu0 0
    %387 = vmatpush2.bf16.msra.mxu0 0
    %388 = vmatprep.subr.bf16.mxu0 0
    %389 = vmatpush2.bf16.msra.mxu0 0
    %390 = vmatprep.subr.bf16.mxu0 0
    %391 = vmatpush2.bf16.msra.mxu0 0
    %392 = vmatprep.subr.bf16.mxu0 0
    %393 = vmatpush2.bf16.msra.mxu0 0
    %394 = vmatprep.mubr.bf16.mxu0 0
    %395 = vmatmul.mubr.bf16.gmra.mxu0 %v360
    %v396 = vpop.f32.mrf.mxu0
    %v397 = vadd.f32 %v195, %v396
    %v398 = vpop.f32.mrf.mxu0
    %v399 = vpop.f32.mrf.mxu0
    %v400 = vpop.f32.mrf.mxu0
    %401 = vdwg.mxu0
    %v402 = vxor.u32 %v397, 2147483648
    %v403 = vmul.f32 %v402, 1.442695
    %v404 = vpow.pop %v403
    %v405 = vadd.f32 %v404, 1.0
    %v406 = vrcp.pop %v405
    %v407 = vmul.f32 1.0, %v406
    %v408 = vtanh.pop %v397
    %v409 = vmul.f32 %v407, %v348
    %411 = vrot.lane.b32.xlu0 %v408, 64
    %v412 = vpop.permute.xlu0 %411
    %v414 = vmul.f32 %v407, %v412
    %416 = vrot.lane.b32.xlu0 %v414, 32
    %v417 = vpop.permute.xlu0 %416
    %v419 = vadd.f32 %v409, %v417
    %v420 = vtanh.pop %v419
    %422 = vrot.lane.b32.xlu0 %v420, 64
    %v423 = vpop.permute.xlu0 %422
    %v425 = vmul.f32 %v407, %v423
    %v426 = vpack.c.bf16 %v425, %v425
    %428 = vrot.lane.b32.xlu0 %v426, 32
    %v429 = vpop.permute.xlu0 %428
    %v431 = vsel %vm145, %v429, 0
    %433 = vmatprep.subr.bf16.mxu0 0
    %434 = vmatpush1.bf16.msra.mxu0 0
    %435 = vmatprep.subr.bf16.mxu0 0
    %436 = vmatpush1.bf16.msra.mxu0 0
    %437 = vmatprep.subr.bf16.mxu0 0
    %438 = vmatpush1.bf16.msra.mxu0 0
    %439 = vmatprep.subr.bf16.mxu0 0
    %440 = vmatpush1.bf16.msra.mxu0 0
    %441 = vmatprep.subr.bf16.mxu0 0
    %442 = vmatpush1.bf16.msra.mxu0 0
    %443 = vmatprep.subr.bf16.mxu0 0
    %444 = vmatpush1.bf16.msra.mxu0 0
    %445 = vmatprep.subr.bf16.mxu0 0
    %446 = vmatpush1.bf16.msra.mxu0 %v214
    %447 = vmatprep.subr.bf16.mxu0 0
    %448 = vmatpush1.bf16.msra.mxu0 %v213
    %449 = vmatprep.subr.bf16.mxu0 0
    %450 = vmatpush2.bf16.msra.mxu0 0
    %451 = vmatprep.subr.bf16.mxu0 0
    %452 = vmatpush2.bf16.msra.mxu0 0
    %453 = vmatprep.subr.bf16.mxu0 0
    %454 = vmatpush2.bf16.msra.mxu0 0
    %455 = vmatprep.subr.bf16.mxu0 0
    %456 = vmatpush2.bf16.msra.mxu0 0
    %457 = vmatprep.subr.bf16.mxu0 0
    %458 = vmatpush2.bf16.msra.mxu0 0
    %459 = vmatprep.subr.bf16.mxu0 0
    %460 = vmatpush2.bf16.msra.mxu0 0
    %461 = vmatprep.subr.bf16.mxu0 0
    %462 = vmatpush2.bf16.msra.mxu0 0
    %463 = vmatprep.subr.bf16.mxu0 0
    %464 = vmatpush2.bf16.msra.mxu0 0
    %465 = vmatprep.mubr.bf16.mxu0 0
    %466 = vmatmul.mubr.bf16.gmra.mxu0 %v431
    %v467 = vpop.f32.mrf.mxu0
    %v468 = vadd.f32 %v198, %v467
    %v469 = vpop.f32.mrf.mxu0
    %v470 = vpop.f32.mrf.mxu0
    %v471 = vpop.f32.mrf.mxu0
    %472 = vdwg.mxu0
    %v473 = vxor.u32 %v468, 2147483648
    %v474 = vmul.f32 %v473, 1.442695
    %v475 = vpow.pop %v474
    %v476 = vadd.f32 %v475, 1.0
    %v477 = vrcp.pop %v476
    %v478 = vmul.f32 1.0, %v477
    %v479 = vtanh.pop %v468
    %v480 = vmul.f32 %v478, %v419
    %482 = vrot.lane.b32.xlu0 %v479, 64
    %v483 = vpop.permute.xlu0 %482
    %v485 = vmul.f32 %v478, %v483
    %487 = vrot.lane.b32.xlu0 %v485, 32
    %v488 = vpop.permute.xlu0 %487
    %v490 = vadd.f32 %v480, %v488
    %v491 = vtanh.pop %v490
    %493 = vrot.lane.b32.xlu0 %v491, 64
    %v494 = vpop.permute.xlu0 %493
    %v496 = vmul.f32 %v478, %v494
    %v497 = vpack.c.bf16 %v354, %v283
    %v498 = vpack.c.bf16 %v496, %v425
    %v499 = vld [vmem:[#allocation8] sm:$0xf]
    %v500 = vld [vmem:[#allocation8 + $0x4] sm:$0xf]
    %v501 = vld [vmem:[#allocation8 + $0x8] sm:$0xf]
    %v502 = vld [vmem:[#allocation8 + $0xc] sm:$0xf]
    %v503 = vld [vmem:[%s5] sm:$0x1]
    %v505 = vlaneseq
    %v506 = vshrl.u32 %v505, 7
    %v507 = vsub.s32 0, %v506
    %v508 = vrot.slane %v503, %v507
    %512 = vrot.lane.b32.xlu0 %v497, 32
    %v513 = vpop.permute.xlu0 %512
    %514 = vrot.lane.b32.xlu0 %v498, 32
    %v515 = vpop.permute.xlu0 %514
    %v520 = vunpack.c.l.b16 %v499
    %v521 = vunpack.c.l.b16 %v500
    %v522 = vunpack.c.l.b16 %v501
    %v523 = vunpack.c.l.b16 %v502
    %v524 = vpack.c.b16 %v521, %v520
    %v525 = vpack.c.b16 %v523, %v522
    %v529 = vsel %vm145, %v513, 0
    %v532 = vsel %vm145, %v515, 0
    %534 = vmatprep.subr.bf16.mxu0 0
    %535 = vmatpush1.bf16.msra.mxu0 0
    %536 = vmatprep.subr.bf16.mxu0 0
    %537 = vmatpush1.bf16.msra.mxu0 0
    %538 = vmatprep.subr.bf16.mxu0 0
    %539 = vmatpush1.bf16.msra.mxu0 0
    %540 = vmatprep.subr.bf16.mxu0 0
    %541 = vmatpush1.bf16.msra.mxu0 0
    %542 = vmatprep.subr.bf16.mxu0 0
    %543 = vmatpush1.bf16.msra.mxu0 0
    %544 = vmatprep.subr.bf16.mxu0 0
    %545 = vmatpush1.bf16.msra.mxu0 0
    %546 = vmatprep.subr.bf16.mxu0 0
    %547 = vmatpush1.bf16.msra.mxu0 %v525
    %548 = vmatprep.subr.bf16.mxu0 0
    %549 = vmatpush1.bf16.msra.mxu0 %v524
    %550 = vmatprep.subr.bf16.mxu0 0
    %551 = vmatpush2.bf16.msra.mxu0 0
    %552 = vmatprep.subr.bf16.mxu0 0
    %553 = vmatpush2.bf16.msra.mxu0 0
    %554 = vmatprep.subr.bf16.mxu0 0
    %555 = vmatpush2.bf16.msra.mxu0 0
    %556 = vmatprep.subr.bf16.mxu0 0
    %557 = vmatpush2.bf16.msra.mxu0 0
    %558 = vmatprep.subr.bf16.mxu0 0
    %559 = vmatpush2.bf16.msra.mxu0 0
    %560 = vmatprep.subr.bf16.mxu0 0
    %561 = vmatpush2.bf16.msra.mxu0 0
    %562 = vmatprep.subr.bf16.mxu0 0
    %563 = vmatpush2.bf16.msra.mxu0 0
    %564 = vmatprep.subr.bf16.mxu0 0
    %565 = vmatpush2.bf16.msra.mxu0 0
    %566 = vmatprep.mubr.bf16.mxu0 0
    %567 = vmatmul.mubr.bf16.gmra.mxu0 %v529
    %v568 = vpop.f32.mrf.mxu0
    %v569 = vadd.f32 %v508, %v568
    %v570 = vpop.f32.mrf.mxu0
    %v571 = vpop.f32.mrf.mxu0
    %v572 = vadd.f32 %v508, %v571
    %v573 = vpop.f32.mrf.mxu0
    %574 = vmatprep.mubr.bf16.mxu0 0
    %575 = vmatmul.mubr.bf16.gmra.mxu0 %v532
    %v576 = vpop.f32.mrf.mxu0
    %v577 = vadd.f32 %v508, %v576
    %v578 = vpop.f32.mrf.mxu0
    %v579 = vpop.f32.mrf.mxu0
    %v580 = vadd.f32 %v508, %v579
    %v581 = vpop.f32.mrf.mxu0
    %582 = vdwg.mxu0
    %v583 = vpack.c.bf16 %v572, %v569
    %v584 = vpack.c.bf16 %v580, %v577
    %587 = vrot.lane.b32.xlu0 %v583, 96
    %v588 = vpop.permute.xlu0 %587
    %589 = vrot.lane.b32.xlu0 %v584, 96
    %v590 = vpop.permute.xlu0 %589
    %vm591 = vcmask 64512
    %v593 = vsel %vm591, %v583, 0
    %v596 = vsel %vm591, %v584, 0
    %v599 = vsel %vm591, %v588, 0
    %v602 = vsel %vm591, %v590, 0
    %604 = vmatprep.subr.bf16.mxu0 0
    %605 = vmatpush1.bf16.xpose.msra.mxu0 0
    %606 = vmatprep.subr.bf16.mxu0 0
    %607 = vmatpush1.bf16.xpose.msra.mxu0 0
    %608 = vmatprep.subr.bf16.mxu0 0
    %609 = vmatpush1.bf16.xpose.msra.mxu0 0
    %610 = vmatprep.subr.bf16.mxu0 0
    %611 = vmatpush1.bf16.xpose.msra.mxu0 0
    %612 = vmatprep.subr.bf16.mxu0 0
    %613 = vmatpush1.bf16.xpose.msra.mxu0 0
    %614 = vmatprep.subr.bf16.mxu0 0
    %615 = vmatpush1.bf16.xpose.msra.mxu0 0
    %616 = vmatprep.subr.bf16.mxu0 0
    %617 = vmatpush1.bf16.xpose.msra.mxu0 %v602
    %618 = vmatprep.subr.bf16.mxu0 0
    %619 = vmatpush1.bf16.xpose.msra.mxu0 %v599
    %620 = vmatprep.subr.bf16.mxu0 0
    %621 = vmatpush2.bf16.xpose.msra.mxu0 0
    %622 = vmatprep.subr.bf16.mxu0 0
    %623 = vmatpush2.bf16.xpose.msra.mxu0 0
    %624 = vmatprep.subr.bf16.mxu0 0
    %625 = vmatpush2.bf16.xpose.msra.mxu0 0
    %626 = vmatprep.subr.bf16.mxu0 0
    %627 = vmatpush2.bf16.xpose.msra.mxu0 0
    %628 = vmatprep.subr.bf16.mxu0 0
    %629 = vmatpush2.bf16.xpose.msra.mxu0 0
    %630 = vmatprep.subr.bf16.mxu0 0
    %631 = vmatpush2.bf16.xpose.msra.mxu0 0
    %632 = vmatprep.subr.bf16.mxu0 0
    %633 = vmatpush2.bf16.xpose.msra.mxu0 0
    %634 = vmatprep.subr.bf16.mxu0 0
    %635 = vmatpush2.bf16.xpose.msra.mxu0 0
    %636 = vmatprep.mubr.bf16.mxu0 0
    %637 = vmatmul.mubr.bf16.gmra.mxu0 %v593
    %v638 = vpop.f32.mrf.mxu0
    %v639 = vadd.f32 0.0, %v638
    %v640 = vpop.f32.mrf.mxu0
    %v641 = vpop.f32.mrf.mxu0
    %v642 = vadd.f32 0.0, %v641
    %v643 = vpop.f32.mrf.mxu0
    %644 = vmatprep.mubr.bf16.mxu0 0
    %645 = vmatmul.mubr.bf16.gmra.mxu0 %v596
    %v646 = vpop.f32.mrf.mxu0
    %v647 = vadd.f32 0.0, %v646
    %v648 = vpop.f32.mrf.mxu0
    %v649 = vpop.f32.mrf.mxu0
    %v650 = vadd.f32 0.0, %v649
    %v651 = vpop.f32.mrf.mxu0
    %652 = vdwg.mxu0
    %653 = vrot.lane.b32.xlu0 %v583, 120
    %v654 = vpop.permute.xlu0 %653
    %655 = vrot.lane.b32.xlu0 %v584, 120
    %v656 = vpop.permute.xlu0 %655
    %657 = vrot.lane.b32.xlu0 %v583, 88
    %v658 = vpop.permute.xlu0 %657
    %659 = vrot.lane.b32.xlu0 %v584, 88
    %v660 = vpop.permute.xlu0 %659
    %v662 = vsel %vm591, %v654, 0
    %v665 = vsel %vm591, %v656, 0
    %v668 = vsel %vm591, %v658, 0
    %v671 = vsel %vm591, %v660, 0
    %673 = vmatprep.subr.bf16.mxu0 0
    %674 = vmatpush1.bf16.xpose.msra.mxu0 0
    %675 = vmatprep.subr.bf16.mxu0 0
    %676 = vmatpush1.bf16.xpose.msra.mxu0 0
    %677 = vmatprep.subr.bf16.mxu0 0
    %678 = vmatpush1.bf16.xpose.msra.mxu0 0
    %679 = vmatprep.subr.bf16.mxu0 0
    %680 = vmatpush1.bf16.xpose.msra.mxu0 0
    %681 = vmatprep.subr.bf16.mxu0 0
    %682 = vmatpush1.bf16.xpose.msra.mxu0 0
    %683 = vmatprep.subr.bf16.mxu0 0
    %684 = vmatpush1.bf16.xpose.msra.mxu0 0
    %685 = vmatprep.subr.bf16.mxu0 0
    %686 = vmatpush1.bf16.xpose.msra.mxu0 %v671
    %687 = vmatprep.subr.bf16.mxu0 0
    %688 = vmatpush1.bf16.xpose.msra.mxu0 %v668
    %689 = vmatprep.subr.bf16.mxu0 0
    %690 = vmatpush2.bf16.xpose.msra.mxu0 0
    %691 = vmatprep.subr.bf16.mxu0 0
    %692 = vmatpush2.bf16.xpose.msra.mxu0 0
    %693 = vmatprep.subr.bf16.mxu0 0
    %694 = vmatpush2.bf16.xpose.msra.mxu0 0
    %695 = vmatprep.subr.bf16.mxu0 0
    %696 = vmatpush2.bf16.xpose.msra.mxu0 0
    %697 = vmatprep.subr.bf16.mxu0 0
    %698 = vmatpush2.bf16.xpose.msra.mxu0 0
    %699 = vmatprep.subr.bf16.mxu0 0
    %700 = vmatpush2.bf16.xpose.msra.mxu0 0
    %701 = vmatprep.subr.bf16.mxu0 0
    %702 = vmatpush2.bf16.xpose.msra.mxu0 0
    %703 = vmatprep.subr.bf16.mxu0 0
    %704 = vmatpush2.bf16.xpose.msra.mxu0 0
    %705 = vmatprep.mubr.bf16.mxu0 0
    %706 = vmatmul.mubr.bf16.gmra.mxu0 %v662
    %v707 = vpop.f32.mrf.mxu0
    %v708 = vadd.f32 0.0, %v707
    %v709 = vpop.f32.mrf.mxu0
    %v710 = vpop.f32.mrf.mxu0
    %v711 = vadd.f32 0.0, %v710
    %v712 = vpop.f32.mrf.mxu0
    %713 = vmatprep.mubr.bf16.mxu0 0
    %714 = vmatmul.mubr.bf16.gmra.mxu0 %v665
    %v715 = vpop.f32.mrf.mxu0
    %v716 = vadd.f32 0.0, %v715
    %v717 = vpop.f32.mrf.mxu0
    %v718 = vpop.f32.mrf.mxu0
    %v719 = vadd.f32 0.0, %v718
    %v720 = vpop.f32.mrf.mxu0
    %721 = vdwg.mxu0
    %722 = vrot.lane.b32.xlu0 %v583, 112
    %v723 = vpop.permute.xlu0 %722
    %724 = vrot.lane.b32.xlu0 %v584, 112
    %v725 = vpop.permute.xlu0 %724
    %726 = vrot.lane.b32.xlu0 %v583, 80
    %v727 = vpop.permute.xlu0 %726
    %728 = vrot.lane.b32.xlu0 %v584, 80
    %v729 = vpop.permute.xlu0 %728
    %v731 = vsel %vm591, %v723, 0
    %v734 = vsel %vm591, %v725, 0
    %v737 = vsel %vm591, %v727, 0
    %v740 = vsel %vm591, %v729, 0
    %742 = vmatprep.subr.bf16.mxu0 0
    %743 = vmatpush1.bf16.xpose.msra.mxu0 0
    %744 = vmatprep.subr.bf16.mxu0 0
    %745 = vmatpush1.bf16.xpose.msra.mxu0 0
    %746 = vmatprep.subr.bf16.mxu0 0
    %747 = vmatpush1.bf16.xpose.msra.mxu0 0
    %748 = vmatprep.subr.bf16.mxu0 0
    %749 = vmatpush1.bf16.xpose.msra.mxu0 0
    %750 = vmatprep.subr.bf16.mxu0 0
    %751 = vmatpush1.bf16.xpose.msra.mxu0 0
    %752 = vmatprep.subr.bf16.mxu0 0
    %753 = vmatpush1.bf16.xpose.msra.mxu0 0
    %754 = vmatprep.subr.bf16.mxu0 0
    %755 = vmatpush1.bf16.xpose.msra.mxu0 %v740
    %756 = vmatprep.subr.bf16.mxu0 0
    %757 = vmatpush1.bf16.xpose.msra.mxu0 %v737
    %758 = vmatprep.subr.bf16.mxu0 0
    %759 = vmatpush2.bf16.xpose.msra.mxu0 0
    %760 = vmatprep.subr.bf16.mxu0 0
    %761 = vmatpush2.bf16.xpose.msra.mxu0 0
    %762 = vmatprep.subr.bf16.mxu0 0
    %763 = vmatpush2.bf16.xpose.msra.mxu0 0
    %764 = vmatprep.subr.bf16.mxu0 0
    %765 = vmatpush2.bf16.xpose.msra.mxu0 0
    %766 = vmatprep.subr.bf16.mxu0 0
    %767 = vmatpush2.bf16.xpose.msra.mxu0 0
    %768 = vmatprep.subr.bf16.mxu0 0
    %769 = vmatpush2.bf16.xpose.msra.mxu0 0
    %770 = vmatprep.subr.bf16.mxu0 0
    %771 = vmatpush2.bf16.xpose.msra.mxu0 0
    %772 = vmatprep.subr.bf16.mxu0 0
    %773 = vmatpush2.bf16.xpose.msra.mxu0 0
    %774 = vmatprep.mubr.bf16.mxu0 0
    %775 = vmatmul.mubr.bf16.gmra.mxu0 %v731
    %v776 = vpop.f32.mrf.mxu0
    %v777 = vadd.f32 0.0, %v776
    %v778 = vpop.f32.mrf.mxu0
    %v779 = vpop.f32.mrf.mxu0
    %v780 = vadd.f32 0.0, %v779
    %v781 = vpop.f32.mrf.mxu0
    %782 = vmatprep.mubr.bf16.mxu0 0
    %783 = vmatmul.mubr.bf16.gmra.mxu0 %v734
    %v784 = vpop.f32.mrf.mxu0
    %v785 = vadd.f32 0.0, %v784
    %v786 = vpop.f32.mrf.mxu0
    %v787 = vpop.f32.mrf.mxu0
    %v788 = vadd.f32 0.0, %v787
    %v789 = vpop.f32.mrf.mxu0
    %790 = vdwg.mxu0
    %791 = vrot.lane.b32.xlu0 %v583, 104
    %v792 = vpop.permute.xlu0 %791
    %793 = vrot.lane.b32.xlu0 %v584, 104
    %v794 = vpop.permute.xlu0 %793
    %795 = vrot.lane.b32.xlu0 %v583, 72
    %v796 = vpop.permute.xlu0 %795
    %797 = vrot.lane.b32.xlu0 %v584, 72
    %v798 = vpop.permute.xlu0 %797
    %v800 = vsel %vm591, %v792, 0
    %v803 = vsel %vm591, %v794, 0
    %v806 = vsel %vm591, %v796, 0
    %v809 = vsel %vm591, %v798, 0
    %811 = vmatprep.subr.bf16.mxu0 0
    %812 = vmatpush1.bf16.xpose.msra.mxu0 0
    %813 = vmatprep.subr.bf16.mxu0 0
    %814 = vmatpush1.bf16.xpose.msra.mxu0 0
    %815 = vmatprep.subr.bf16.mxu0 0
    %816 = vmatpush1.bf16.xpose.msra.mxu0 0
    %817 = vmatprep.subr.bf16.mxu0 0
    %818 = vmatpush1.bf16.xpose.msra.mxu0 0
    %819 = vmatprep.subr.bf16.mxu0 0
    %820 = vmatpush1.bf16.xpose.msra.mxu0 0
    %821 = vmatprep.subr.bf16.mxu0 0
    %822 = vmatpush1.bf16.xpose.msra.mxu0 0
    %823 = vmatprep.subr.bf16.mxu0 0
    %824 = vmatpush1.bf16.xpose.msra.mxu0 %v809
    %825 = vmatprep.subr.bf16.mxu0 0
    %826 = vmatpush1.bf16.xpose.msra.mxu0 %v806
    %827 = vmatprep.subr.bf16.mxu0 0
    %828 = vmatpush2.bf16.xpose.msra.mxu0 0
    %829 = vmatprep.subr.bf16.mxu0 0
    %830 = vmatpush2.bf16.xpose.msra.mxu0 0
    %831 = vmatprep.subr.bf16.mxu0 0
    %832 = vmatpush2.bf16.xpose.msra.mxu0 0
    %833 = vmatprep.subr.bf16.mxu0 0
    %834 = vmatpush2.bf16.xpose.msra.mxu0 0
    %835 = vmatprep.subr.bf16.mxu0 0
    %836 = vmatpush2.bf16.xpose.msra.mxu0 0
    %837 = vmatprep.subr.bf16.mxu0 0
    %838 = vmatpush2.bf16.xpose.msra.mxu0 0
    %839 = vmatprep.subr.bf16.mxu0 0
    %840 = vmatpush2.bf16.xpose.msra.mxu0 0
    %841 = vmatprep.subr.bf16.mxu0 0
    %842 = vmatpush2.bf16.xpose.msra.mxu0 0
    %843 = vmatprep.mubr.bf16.mxu0 0
    %844 = vmatmul.mubr.bf16.gmra.mxu0 %v800
    %v845 = vpop.f32.mrf.mxu0
    %v846 = vadd.f32 0.0, %v845
    %v847 = vpop.f32.mrf.mxu0
    %v848 = vpop.f32.mrf.mxu0
    %v849 = vadd.f32 0.0, %v848
    %v850 = vpop.f32.mrf.mxu0
    %851 = vmatprep.mubr.bf16.mxu0 0
    %852 = vmatmul.mubr.bf16.gmra.mxu0 %v803
    %v853 = vpop.f32.mrf.mxu0
    %v854 = vadd.f32 0.0, %v853
    %v855 = vpop.f32.mrf.mxu0
    %v856 = vpop.f32.mrf.mxu0
    %v857 = vadd.f32 0.0, %v856
    %v858 = vpop.f32.mrf.mxu0
    %859 = vdwg.mxu0
    %v860 = vmul.f32 %v639, 0.35355338
    %v861 = vmul.f32 %v642, 0.35355338
    %v862 = vmul.f32 %v647, 0.35355338
    %v863 = vmul.f32 %v650, 0.35355338
    %v864 = vmul.f32 %v708, 0.35355338
    %v865 = vmul.f32 %v711, 0.35355338
    %v866 = vmul.f32 %v716, 0.35355338
    %v867 = vmul.f32 %v719, 0.35355338
    %v868 = vmul.f32 %v777, 0.35355338
    %v869 = vmul.f32 %v780, 0.35355338
    %v870 = vmul.f32 %v785, 0.35355338
    %v871 = vmul.f32 %v788, 0.35355338
    %v872 = vmul.f32 %v846, 0.35355338
    %v873 = vmul.f32 %v849, 0.35355338
    %v874 = vmul.f32 %v854, 0.35355338
    %v875 = vmul.f32 %v857, 0.35355338
    %v876 = vlaneseq
    %v877 = vshrl.u32 %v876, 7
    %v878 = vadd.s32 %v877, 8
    %v879 = vadd.s32 %v877, 16
    %v880 = vadd.s32 %v877, 24
    %v881 = vadd.s32 %v877, 32
    %v882 = vadd.s32 %v877, 40
    %v883 = vadd.s32 %v877, 48
    %v884 = vadd.s32 %v877, 56
    %v885 = vadd.s32 %v877, 64
    %v886 = vadd.s32 %v877, 72
    %v887 = vadd.s32 %v877, 80
    %v888 = vadd.s32 %v877, 88
    %v889 = vadd.s32 %v877, 96
    %v890 = vadd.s32 %v877, 104
    %v891 = vadd.s32 %v877, 112
    %v892 = vadd.s32 %v877, 120
    %v893 = vlaneseq
    %v894 = vand.u32 %v893, 127
    %vm895 = vcmp.lt.s32.totalorder %v877, 0
    %v896 = vsub.s32 0, %v877
    %v897 = vsel %vm895, %v896, %v877
    %v898 = vshrl.u32 %v897, 3
    %v899 = vand.u32 %v897, 7
    %v900 = vsub.s32 0, %v899
    %v901 = vsel %vm895, %v900, %v899
    %vm902 = vcmp.lt.s32.totalorder %v878, 0
    %v903 = vsub.s32 0, %v878
    %v904 = vsel %vm902, %v903, %v878
    %v905 = vshrl.u32 %v904, 3
    %v906 = vand.u32 %v904, 7
    %v907 = vsub.s32 0, %v906
    %v908 = vsel %vm902, %v907, %v906
    %vm909 = vcmp.lt.s32.totalorder %v879, 0
    %v910 = vsub.s32 0, %v879
    %v911 = vsel %vm909, %v910, %v879
    %v912 = vshrl.u32 %v911, 3
    %v913 = vand.u32 %v911, 7
    %v914 = vsub.s32 0, %v913
    %v915 = vsel %vm909, %v914, %v913
    %vm916 = vcmp.lt.s32.totalorder %v880, 0
    %v917 = vsub.s32 0, %v880
    %v918 = vsel %vm916, %v917, %v880
    %v919 = vshrl.u32 %v918, 3
    %v920 = vand.u32 %v918, 7
    %v921 = vsub.s32 0, %v920
    %v922 = vsel %vm916, %v921, %v920
    %vm923 = vcmp.lt.s32.totalorder %v881, 0
    %v924 = vsub.s32 0, %v881
    %v925 = vsel %vm923, %v924, %v881
    %v926 = vshrl.u32 %v925, 3
    %v927 = vand.u32 %v925, 7
    %v928 = vsub.s32 0, %v927
    %v929 = vsel %vm923, %v928, %v927
    %vm930 = vcmp.lt.s32.totalorder %v882, 0
    %v931 = vsub.s32 0, %v882
    %v932 = vsel %vm930, %v931, %v882
    %v933 = vshrl.u32 %v932, 3
    %v934 = vand.u32 %v932, 7
    %v935 = vsub.s32 0, %v934
    %v936 = vsel %vm930, %v935, %v934
    %vm937 = vcmp.lt.s32.totalorder %v883, 0
    %v938 = vsub.s32 0, %v883
    %v939 = vsel %vm937, %v938, %v883
    %v940 = vshrl.u32 %v939, 3
    %v941 = vand.u32 %v939, 7
    %v942 = vsub.s32 0, %v941
    %v943 = vsel %vm937, %v942, %v941
    %vm944 = vcmp.lt.s32.totalorder %v884, 0
    %v945 = vsub.s32 0, %v884
    %v946 = vsel %vm944, %v945, %v884
    %v947 = vshrl.u32 %v946, 3
    %v948 = vand.u32 %v946, 7
    %v949 = vsub.s32 0, %v948
    %v950 = vsel %vm944, %v949, %v948
    %vm951 = vcmp.lt.s32.totalorder %v885, 0
    %v952 = vsub.s32 0, %v885
    %v953 = vsel %vm951, %v952, %v885
    %v954 = vshrl.u32 %v953, 3
    %v955 = vand.u32 %v953, 7
    %v956 = vsub.s32 0, %v955
    %v957 = vsel %vm951, %v956, %v955
    %vm958 = vcmp.lt.s32.totalorder %v886, 0
    %v959 = vsub.s32 0, %v886
    %v960 = vsel %vm958, %v959, %v886
    %v961 = vshrl.u32 %v960, 3
    %v962 = vand.u32 %v960, 7
    %v963 = vsub.s32 0, %v962
    %v964 = vsel %vm958, %v963, %v962
    %vm965 = vcmp.lt.s32.totalorder %v887, 0
    %v966 = vsub.s32 0, %v887
    %v967 = vsel %vm965, %v966, %v887
    %v968 = vshrl.u32 %v967, 3
    %v969 = vand.u32 %v967, 7
    %v970 = vsub.s32 0, %v969
    %v971 = vsel %vm965, %v970, %v969
    %vm972 = vcmp.lt.s32.totalorder %v888, 0
    %v973 = vsub.s32 0, %v888
    %v974 = vsel %vm972, %v973, %v888
    %v975 = vshrl.u32 %v974, 3
    %v976 = vand.u32 %v974, 7
    %v977 = vsub.s32 0, %v976
    %v978 = vsel %vm972, %v977, %v976
    %vm979 = vcmp.lt.s32.totalorder %v889, 0
    %v980 = vsub.s32 0, %v889
    %v981 = vsel %vm979, %v980, %v889
    %v982 = vshrl.u32 %v981, 3
    %v983 = vand.u32 %v981, 7
    %v984 = vsub.s32 0, %v983
    %v985 = vsel %vm979, %v984, %v983
    %vm986 = vcmp.lt.s32.totalorder %v890, 0
    %v987 = vsub.s32 0, %v890
    %v988 = vsel %vm986, %v987, %v890
    %v989 = vshrl.u32 %v988, 3
    %v990 = vand.u32 %v988, 7
    %v991 = vsub.s32 0, %v990
    %v992 = vsel %vm986, %v991, %v990
    %vm993 = vcmp.lt.s32.totalorder %v891, 0
    %v994 = vsub.s32 0, %v891
    %v995 = vsel %vm993, %v994, %v891
    %v996 = vshrl.u32 %v995, 3
    %v997 = vand.u32 %v995, 7
    %v998 = vsub.s32 0, %v997
    %v999 = vsel %vm993, %v998, %v997
    %vm1000 = vcmp.lt.s32.totalorder %v892, 0
    %v1001 = vsub.s32 0, %v892
    %v1002 = vsel %vm1000, %v1001, %v892
    %v1003 = vshrl.u32 %v1002, 3
    %v1004 = vand.u32 %v1002, 7
    %v1005 = vsub.s32 0, %v1004
    %v1006 = vsel %vm1000, %v1005, %v1004
    %vm1007 = vcmp.ne.s32.totalorder %v901, 0
    %vm1008 = vcmp.ne.s32.totalorder %v908, 0
    %vm1009 = vcmp.ne.s32.totalorder %v915, 0
    %vm1010 = vcmp.ne.s32.totalorder %v922, 0
    %vm1011 = vcmp.ne.s32.totalorder %v929, 0
    %vm1012 = vcmp.ne.s32.totalorder %v936, 0
    %vm1013 = vcmp.ne.s32.totalorder %v943, 0
    %vm1014 = vcmp.ne.s32.totalorder %v950, 0
    %vm1015 = vcmp.ne.s32.totalorder %v957, 0
    %vm1016 = vcmp.ne.s32.totalorder %v964, 0
    %vm1017 = vcmp.ne.s32.totalorder %v971, 0
    %vm1018 = vcmp.ne.s32.totalorder %v978, 0
    %vm1019 = vcmp.ne.s32.totalorder %v985, 0
    %vm1020 = vcmp.ne.s32.totalorder %v992, 0
    %vm1021 = vcmp.ne.s32.totalorder %v999, 0
    %vm1022 = vcmp.ne.s32.totalorder %v1006, 0
    %vm1023 = vcmp.lt.s32.totalorder %v901, 0
    %vm1024 = vcmp.lt.s32.totalorder %v908, 0
    %vm1025 = vcmp.lt.s32.totalorder %v915, 0
    %vm1026 = vcmp.lt.s32.totalorder %v922, 0
    %vm1027 = vcmp.lt.s32.totalorder %v929, 0
    %vm1028 = vcmp.lt.s32.totalorder %v936, 0
    %vm1029 = vcmp.lt.s32.totalorder %v943, 0
    %vm1030 = vcmp.lt.s32.totalorder %v950, 0
    %vm1031 = vcmp.lt.s32.totalorder %v957, 0
    %vm1032 = vcmp.lt.s32.totalorder %v964, 0
    %vm1033 = vcmp.lt.s32.totalorder %v971, 0
    %vm1034 = vcmp.lt.s32.totalorder %v978, 0
    %vm1035 = vcmp.lt.s32.totalorder %v985, 0
    %vm1036 = vcmp.lt.s32.totalorder %v992, 0
    %vm1037 = vcmp.lt.s32.totalorder %v999, 0
    %vm1038 = vcmp.lt.s32.totalorder %v1006, 0
    %vm1039 = vmand %vm1023, %vm1007
    %vm1040 = vmand %vm1024, %vm1008
    %vm1041 = vmand %vm1025, %vm1009
    %vm1042 = vmand %vm1026, %vm1010
    %vm1043 = vmand %vm1027, %vm1011
    %vm1044 = vmand %vm1028, %vm1012
    %vm1045 = vmand %vm1029, %vm1013
    %vm1046 = vmand %vm1030, %vm1014
    %vm1047 = vmand %vm1031, %vm1015
    %vm1048 = vmand %vm1032, %vm1016
    %vm1049 = vmand %vm1033, %vm1017
    %vm1050 = vmand %vm1034, %vm1018
    %vm1051 = vmand %vm1035, %vm1019
    %vm1052 = vmand %vm1036, %vm1020
    %vm1053 = vmand %vm1037, %vm1021
    %vm1054 = vmand %vm1038, %vm1022
    %v1055 = vadd.s32 %v901, 8
    %v1056 = vadd.s32 %v908, 8
    %v1057 = vadd.s32 %v915, 8
    %v1058 = vadd.s32 %v922, 8
    %v1059 = vadd.s32 %v929, 8
    %v1060 = vadd.s32 %v936, 8
    %v1061 = vadd.s32 %v943, 8
    %v1062 = vadd.s32 %v950, 8
    %v1063 = vadd.s32 %v957, 8
    %v1064 = vadd.s32 %v964, 8
    %v1065 = vadd.s32 %v971, 8
    %v1066 = vadd.s32 %v978, 8
    %v1067 = vadd.s32 %v985, 8
    %v1068 = vadd.s32 %v992, 8
    %v1069 = vadd.s32 %v999, 8
    %v1070 = vadd.s32 %v1006, 8
    %v1071 = vsel %vm1039, %v1055, %v901
    %v1072 = vsel %vm1040, %v1056, %v908
    %v1073 = vsel %vm1041, %v1057, %v915
    %v1074 = vsel %vm1042, %v1058, %v922
    %v1075 = vsel %vm1043, %v1059, %v929
    %v1076 = vsel %vm1044, %v1060, %v936
    %v1077 = vsel %vm1045, %v1061, %v943
    %v1078 = vsel %vm1046, %v1062, %v950
    %v1079 = vsel %vm1047, %v1063, %v957
    %v1080 = vsel %vm1048, %v1064, %v964
    %v1081 = vsel %vm1049, %v1065, %v971
    %v1082 = vsel %vm1050, %v1066, %v978
    %v1083 = vsel %vm1051, %v1067, %v985
    %v1084 = vsel %vm1052, %v1068, %v992
    %v1085 = vsel %vm1053, %v1069, %v999
    %v1086 = vsel %vm1054, %v1070, %v1006
    %vm1087 = vcmp.lt.s32.totalorder %v894, 0
    %v1088 = vsub.s32 0, %v894
    %v1089 = vsel %vm1087, %v1088, %v894
    %v1090 = vshrl.u32 %v1089, 3
    %v1091 = vand.u32 %v1089, 7
    %v1092 = vsub.s32 0, %v1091
    %v1093 = vsel %vm1087, %v1092, %v1091
    %vm1094 = vcmp.ne.s32.totalorder %v1093, 0
    %vm1095 = vcmp.lt.s32.totalorder %v1093, 0
    %vm1096 = vmand %vm1095, %vm1094
    %v1097 = vadd.s32 %v1093, 8
    %v1098 = vsel %vm1096, %v1097, %v1093
    %vm1099 = vcmp.eq.s32.totalorder %v1071, %v1098
    %vm1100 = vcmp.eq.s32.totalorder %v1072, %v1098
    %vm1101 = vcmp.eq.s32.totalorder %v1073, %v1098
    %vm1102 = vcmp.eq.s32.totalorder %v1074, %v1098
    %vm1103 = vcmp.eq.s32.totalorder %v1075, %v1098
    %vm1104 = vcmp.eq.s32.totalorder %v1076, %v1098
    %vm1105 = vcmp.eq.s32.totalorder %v1077, %v1098
    %vm1106 = vcmp.eq.s32.totalorder %v1078, %v1098
    %vm1107 = vcmp.eq.s32.totalorder %v1079, %v1098
    %vm1108 = vcmp.eq.s32.totalorder %v1080, %v1098
    %vm1109 = vcmp.eq.s32.totalorder %v1081, %v1098
    %vm1110 = vcmp.eq.s32.totalorder %v1082, %v1098
    %vm1111 = vcmp.eq.s32.totalorder %v1083, %v1098
    %vm1112 = vcmp.eq.s32.totalorder %v1084, %v1098
    %vm1113 = vcmp.eq.s32.totalorder %v1085, %v1098
    %vm1114 = vcmp.eq.s32.totalorder %v1086, %v1098
    %v1115 = vsel %vm1099, %v860, -1e+30
    %v1116 = vsel %vm1100, %v861, -1e+30
    %v1117 = vsel %vm1101, %v862, -1e+30
    %v1118 = vsel %vm1102, %v863, -1e+30
    %v1119 = vsel %vm1103, %v864, -1e+30
    %v1120 = vsel %vm1104, %v865, -1e+30
    %v1121 = vsel %vm1105, %v866, -1e+30
    %v1122 = vsel %vm1106, %v867, -1e+30
    %v1123 = vsel %vm1107, %v868, -1e+30
    %v1124 = vsel %vm1108, %v869, -1e+30
    %v1125 = vsel %vm1109, %v870, -1e+30
    %v1126 = vsel %vm1110, %v871, -1e+30
    %v1127 = vsel %vm1111, %v872, -1e+30
    %v1128 = vsel %vm1112, %v873, -1e+30
    %v1129 = vsel %vm1113, %v874, -1e+30
    %v1130 = vsel %vm1114, %v875, -1e+30
    %v1131 = vsel %vm145, %v1115, -inf
    %1132 = vmax.xlane.f32.xlu0 %v1131
    %v1133 = vpop.xlane.xlu0 %1132
    %v1134 = vsel %vm145, %v1116, -inf
    %1135 = vmax.xlane.f32.xlu0 %v1134
    %v1136 = vpop.xlane.xlu0 %1135
    %v1137 = vsel %vm145, %v1117, -inf
    %1138 = vmax.xlane.f32.xlu0 %v1137
    %v1139 = vpop.xlane.xlu0 %1138
    %v1140 = vsel %vm145, %v1118, -inf
    %1141 = vmax.xlane.f32.xlu0 %v1140
    %v1142 = vpop.xlane.xlu0 %1141
    %v1143 = vsel %vm145, %v1119, -inf
    %1144 = vmax.xlane.f32.xlu0 %v1143
    %v1145 = vpop.xlane.xlu0 %1144
    %v1146 = vsel %vm145, %v1120, -inf
    %1147 = vmax.xlane.f32.xlu0 %v1146
    %v1148 = vpop.xlane.xlu0 %1147
    %v1149 = vsel %vm145, %v1121, -inf
    %1150 = vmax.xlane.f32.xlu0 %v1149
    %v1151 = vpop.xlane.xlu0 %1150
    %v1152 = vsel %vm145, %v1122, -inf
    %1153 = vmax.xlane.f32.xlu0 %v1152
    %v1154 = vpop.xlane.xlu0 %1153
    %v1155 = vsel %vm145, %v1123, -inf
    %1156 = vmax.xlane.f32.xlu0 %v1155
    %v1157 = vpop.xlane.xlu0 %1156
    %v1158 = vsel %vm145, %v1124, -inf
    %1159 = vmax.xlane.f32.xlu0 %v1158
    %v1160 = vpop.xlane.xlu0 %1159
    %v1161 = vsel %vm145, %v1125, -inf
    %1162 = vmax.xlane.f32.xlu0 %v1161
    %v1163 = vpop.xlane.xlu0 %1162
    %v1164 = vsel %vm145, %v1126, -inf
    %1165 = vmax.xlane.f32.xlu0 %v1164
    %v1166 = vpop.xlane.xlu0 %1165
    %v1167 = vsel %vm145, %v1127, -inf
    %1168 = vmax.xlane.f32.xlu0 %v1167
    %v1169 = vpop.xlane.xlu0 %1168
    %v1170 = vsel %vm145, %v1128, -inf
    %1171 = vmax.xlane.f32.xlu0 %v1170
    %v1172 = vpop.xlane.xlu0 %1171
    %v1173 = vsel %vm145, %v1129, -inf
    %1174 = vmax.xlane.f32.xlu0 %v1173
    %v1175 = vpop.xlane.xlu0 %1174
    %v1176 = vsel %vm145, %v1130, -inf
    %1177 = vmax.xlane.f32.xlu0 %v1176
    %v1178 = vpop.xlane.xlu0 %1177
    %v1179 = vsub.f32 %v1115, %v1133
    %v1180 = vsub.f32 %v1116, %v1136
    %v1181 = vsub.f32 %v1117, %v1139
    %v1182 = vsub.f32 %v1118, %v1142
    %v1183 = vsub.f32 %v1119, %v1145
    %v1184 = vsub.f32 %v1120, %v1148
    %v1185 = vsub.f32 %v1121, %v1151
    %v1186 = vsub.f32 %v1122, %v1154
    %v1187 = vsub.f32 %v1123, %v1157
    %v1188 = vsub.f32 %v1124, %v1160
    %v1189 = vsub.f32 %v1125, %v1163
    %v1190 = vsub.f32 %v1126, %v1166
    %v1191 = vsub.f32 %v1127, %v1169
    %v1192 = vsub.f32 %v1128, %v1172
    %v1193 = vsub.f32 %v1129, %v1175
    %v1194 = vsub.f32 %v1130, %v1178
    %v1195 = vmul.f32 %v1179, 1.442695
    %v1196 = vpow.pop %v1195
    %v1197 = vmul.f32 %v1180, 1.442695
    %v1198 = vpow.pop %v1197
    %v1199 = vmul.f32 %v1181, 1.442695
    %v1200 = vpow.pop %v1199
    %v1201 = vmul.f32 %v1182, 1.442695
    %v1202 = vpow.pop %v1201
    %v1203 = vmul.f32 %v1183, 1.442695
    %v1204 = vpow.pop %v1203
    %v1205 = vmul.f32 %v1184, 1.442695
    %v1206 = vpow.pop %v1205
    %v1207 = vmul.f32 %v1185, 1.442695
    %v1208 = vpow.pop %v1207
    %v1209 = vmul.f32 %v1186, 1.442695
    %v1210 = vpow.pop %v1209
    %v1211 = vmul.f32 %v1187, 1.442695
    %v1212 = vpow.pop %v1211
    %v1213 = vmul.f32 %v1188, 1.442695
    %v1214 = vpow.pop %v1213
    %v1215 = vmul.f32 %v1189, 1.442695
    %v1216 = vpow.pop %v1215
    %v1217 = vmul.f32 %v1190, 1.442695
    %v1218 = vpow.pop %v1217
    %v1219 = vmul.f32 %v1191, 1.442695
    %v1220 = vpow.pop %v1219
    %v1221 = vmul.f32 %v1192, 1.442695
    %v1222 = vpow.pop %v1221
    %v1223 = vmul.f32 %v1193, 1.442695
    %v1224 = vpow.pop %v1223
    %v1225 = vmul.f32 %v1194, 1.442695
    %v1226 = vpow.pop %v1225
    %v1227 = vsel %vm145, %v1196, 0.0
    %1228 = vadd.xlane.f32.xlu0 %v1227
    %v1229 = vpop.xlane.xlu0 %1228
    %v1230 = vsel %vm145, %v1198, 0.0
    %1231 = vadd.xlane.f32.xlu0 %v1230
    %v1232 = vpop.xlane.xlu0 %1231
    %v1233 = vsel %vm145, %v1200, 0.0
    %1234 = vadd.xlane.f32.xlu0 %v1233
    %v1235 = vpop.xlane.xlu0 %1234
    %v1236 = vsel %vm145, %v1202, 0.0
    %1237 = vadd.xlane.f32.xlu0 %v1236
    %v1238 = vpop.xlane.xlu0 %1237
    %v1239 = vsel %vm145, %v1204, 0.0
    %1240 = vadd.xlane.f32.xlu0 %v1239
    %v1241 = vpop.xlane.xlu0 %1240
    %v1242 = vsel %vm145, %v1206, 0.0
    %1243 = vadd.xlane.f32.xlu0 %v1242
    %v1244 = vpop.xlane.xlu0 %1243
    %v1245 = vsel %vm145, %v1208, 0.0
    %1246 = vadd.xlane.f32.xlu0 %v1245
    %v1247 = vpop.xlane.xlu0 %1246
    %v1248 = vsel %vm145, %v1210, 0.0
    %1249 = vadd.xlane.f32.xlu0 %v1248
    %v1250 = vpop.xlane.xlu0 %1249
    %v1251 = vsel %vm145, %v1212, 0.0
    %1252 = vadd.xlane.f32.xlu0 %v1251
    %v1253 = vpop.xlane.xlu0 %1252
    %v1254 = vsel %vm145, %v1214, 0.0
    %1255 = vadd.xlane.f32.xlu0 %v1254
    %v1256 = vpop.xlane.xlu0 %1255
    %v1257 = vsel %vm145, %v1216, 0.0
    %1258 = vadd.xlane.f32.xlu0 %v1257
    %v1259 = vpop.xlane.xlu0 %1258
    %v1260 = vsel %vm145, %v1218, 0.0
    %1261 = vadd.xlane.f32.xlu0 %v1260
    %v1262 = vpop.xlane.xlu0 %1261
    %v1263 = vsel %vm145, %v1220, 0.0
    %1264 = vadd.xlane.f32.xlu0 %v1263
    %v1265 = vpop.xlane.xlu0 %1264
    %v1266 = vsel %vm145, %v1222, 0.0
    %1267 = vadd.xlane.f32.xlu0 %v1266
    %v1268 = vpop.xlane.xlu0 %1267
    %v1269 = vsel %vm145, %v1224, 0.0
    %1270 = vadd.xlane.f32.xlu0 %v1269
    %v1271 = vpop.xlane.xlu0 %1270
    %v1272 = vsel %vm145, %v1226, 0.0
    %1273 = vadd.xlane.f32.xlu0 %v1272
    %v1274 = vpop.xlane.xlu0 %1273
    %v1275 = vrcp.pop %v1229
    %v1276 = vrcp.pop %v1232
    %v1277 = vrcp.pop %v1235
    %v1278 = vrcp.pop %v1238
    %v1279 = vrcp.pop %v1241
    %v1280 = vrcp.pop %v1244
    %v1281 = vrcp.pop %v1247
    %v1282 = vrcp.pop %v1250
    %v1283 = vrcp.pop %v1253
    %v1284 = vrcp.pop %v1256
    %v1285 = vrcp.pop %v1259
    %v1286 = vrcp.pop %v1262
    %v1287 = vrcp.pop %v1265
    %v1288 = vrcp.pop %v1268
    %v1289 = vrcp.pop %v1271
    %v1290 = vrcp.pop %v1274
    %v1291 = vmul.f32 %v1196, %v1275
    %v1292 = vmul.f32 %v1198, %v1276
    %v1293 = vmul.f32 %v1200, %v1277
    %v1294 = vmul.f32 %v1202, %v1278
    %v1295 = vmul.f32 %v1204, %v1279
    %v1296 = vmul.f32 %v1206, %v1280
    %v1297 = vmul.f32 %v1208, %v1281
    %v1298 = vmul.f32 %v1210, %v1282
    %v1299 = vmul.f32 %v1212, %v1283
    %v1300 = vmul.f32 %v1214, %v1284
    %v1301 = vmul.f32 %v1216, %v1285
    %v1302 = vmul.f32 %v1218, %v1286
    %v1303 = vmul.f32 %v1220, %v1287
    %v1304 = vmul.f32 %v1222, %v1288
    %v1305 = vmul.f32 %v1224, %v1289
    %v1306 = vmul.f32 %v1226, %v1290
    %v1307 = vpack.c.bf16 %v1292, %v1291
    %v1308 = vpack.c.bf16 %v1294, %v1293
    %v1309 = vpack.c.bf16 %v1296, %v1295
    %v1310 = vpack.c.bf16 %v1298, %v1297
    %v1311 = vpack.c.bf16 %v1300, %v1299
    %v1312 = vpack.c.bf16 %v1302, %v1301
    %v1313 = vpack.c.bf16 %v1304, %v1303
    %v1314 = vpack.c.bf16 %v1306, %v1305
    %v1315 = vld [vmem:[#allocation10] sm:$0xf]
    %v1316 = vld [vmem:[#allocation10 + $0x4] sm:$0xf]
    %v1317 = vld [vmem:[#allocation10 + $0x8] sm:$0xf]
    %v1318 = vld [vmem:[#allocation10 + $0xc] sm:$0xf]
    %v1319 = vld [vmem:[%s8] sm:$0x1]
    %v1321 = vlaneseq
    %v1322 = vshrl.u32 %v1321, 7
    %v1323 = vsub.s32 0, %v1322
    %v1324 = vrot.slane %v1319, %v1323
    %v1330 = vunpack.c.l.b16 %v1315
    %v1331 = vunpack.c.l.b16 %v1316
    %v1332 = vunpack.c.l.b16 %v1317
    %v1333 = vunpack.c.l.b16 %v1318
    %v1334 = vpack.c.b16 %v1331, %v1330
    %v1335 = vpack.c.b16 %v1333, %v1332
    %1338 = vmatprep.subr.bf16.mxu0 0
    %1339 = vmatpush1.bf16.msra.mxu0 0
    %1340 = vmatprep.subr.bf16.mxu0 0
    %1341 = vmatpush1.bf16.msra.mxu0 0
    %1342 = vmatprep.subr.bf16.mxu0 0
    %1343 = vmatpush1.bf16.msra.mxu0 0
    %1344 = vmatprep.subr.bf16.mxu0 0
    %1345 = vmatpush1.bf16.msra.mxu0 0
    %1346 = vmatprep.subr.bf16.mxu0 0
    %1347 = vmatpush1.bf16.msra.mxu0 0
    %1348 = vmatprep.subr.bf16.mxu0 0
    %1349 = vmatpush1.bf16.msra.mxu0 0
    %1350 = vmatprep.subr.bf16.mxu0 0
    %1351 = vmatpush1.bf16.msra.mxu0 %v1335
    %1352 = vmatprep.subr.bf16.mxu0 0
    %1353 = vmatpush1.bf16.msra.mxu0 %v1334
    %1354 = vmatprep.subr.bf16.mxu0 0
    %1355 = vmatpush2.bf16.msra.mxu0 0
    %1356 = vmatprep.subr.bf16.mxu0 0
    %1357 = vmatpush2.bf16.msra.mxu0 0
    %1358 = vmatprep.subr.bf16.mxu0 0
    %1359 = vmatpush2.bf16.msra.mxu0 0
    %1360 = vmatprep.subr.bf16.mxu0 0
    %1361 = vmatpush2.bf16.msra.mxu0 0
    %1362 = vmatprep.subr.bf16.mxu0 0
    %1363 = vmatpush2.bf16.msra.mxu0 0
    %1364 = vmatprep.subr.bf16.mxu0 0
    %1365 = vmatpush2.bf16.msra.mxu0 0
    %1366 = vmatprep.subr.bf16.mxu0 0
    %1367 = vmatpush2.bf16.msra.mxu0 0
    %1368 = vmatprep.subr.bf16.mxu0 0
    %1369 = vmatpush2.bf16.msra.mxu0 0
    %1370 = vmatprep.mubr.bf16.mxu0 0
    %1371 = vmatmul.mubr.bf16.gmra.mxu0 %v529
    %v1372 = vpop.f32.mrf.mxu0
    %v1373 = vadd.f32 %v1324, %v1372
    %v1374 = vpop.f32.mrf.mxu0
    %v1375 = vpop.f32.mrf.mxu0
    %v1376 = vadd.f32 %v1324, %v1375
    %v1377 = vpop.f32.mrf.mxu0
    %1378 = vmatprep.mubr.bf16.mxu0 0
    %1379 = vmatmul.mubr.bf16.gmra.mxu0 %v532
    %v1380 = vpop.f32.mrf.mxu0
    %v1381 = vadd.f32 %v1324, %v1380
    %v1382 = vpop.f32.mrf.mxu0
    %v1383 = vpop.f32.mrf.mxu0
    %v1384 = vadd.f32 %v1324, %v1383
    %v1385 = vpop.f32.mrf.mxu0
    %1386 = vdwg.mxu0
    %1387 = vrot.lane.b32.xlu0 %v583, 64
    %v1388 = vpop.permute.xlu0 %1387
    %1389 = vrot.lane.b32.xlu0 %v584, 64
    %v1390 = vpop.permute.xlu0 %1389
    %v1394 = vsel %vm145, %v1307, 0
    %v1397 = vsel %vm145, %v1308, 0
    %1399 = vmatprep.subr.bf16.mxu0 0
    %1400 = vmatpush1.bf16.msra.mxu0 0
    %1401 = vmatprep.subr.bf16.mxu0 0
    %1402 = vmatpush1.bf16.msra.mxu0 0
    %1403 = vmatprep.subr.bf16.mxu0 0
    %1404 = vmatpush1.bf16.msra.mxu0 0
    %1405 = vmatprep.subr.bf16.mxu0 0
    %1406 = vmatpush1.bf16.msra.mxu0 0
    %1407 = vmatprep.subr.bf16.mxu0 0
    %1408 = vmatpush1.bf16.msra.mxu0 0
    %1409 = vmatprep.subr.bf16.mxu0 0
    %1410 = vmatpush1.bf16.msra.mxu0 0
    %1411 = vmatprep.subr.bf16.mxu0 0
    %1412 = vmatpush1.bf16.msra.mxu0 %v1390
    %1413 = vmatprep.subr.bf16.mxu0 0
    %1414 = vmatpush1.bf16.msra.mxu0 %v1388
    %1415 = vmatprep.subr.bf16.mxu0 0
    %1416 = vmatpush2.bf16.msra.mxu0 0
    %1417 = vmatprep.subr.bf16.mxu0 0
    %1418 = vmatpush2.bf16.msra.mxu0 0
    %1419 = vmatprep.subr.bf16.mxu0 0
    %1420 = vmatpush2.bf16.msra.mxu0 0
    %1421 = vmatprep.subr.bf16.mxu0 0
    %1422 = vmatpush2.bf16.msra.mxu0 0
    %1423 = vmatprep.subr.bf16.mxu0 0
    %1424 = vmatpush2.bf16.msra.mxu0 0
    %1425 = vmatprep.subr.bf16.mxu0 0
    %1426 = vmatpush2.bf16.msra.mxu0 0
    %1427 = vmatprep.subr.bf16.mxu0 0
    %1428 = vmatpush2.bf16.msra.mxu0 0
    %1429 = vmatprep.subr.bf16.mxu0 0
    %1430 = vmatpush2.bf16.msra.mxu0 0
    %1431 = vmatprep.mubr.bf16.mxu0 0
    %1432 = vmatmul.mubr.bf16.gmra.mxu0 %v1394
    %v1433 = vpop.f32.mrf.mxu0
    %v1434 = vadd.f32 0.0, %v1433
    %v1435 = vpop.f32.mrf.mxu0
    %v1436 = vpop.f32.mrf.mxu0
    %v1437 = vadd.f32 0.0, %v1436
    %v1438 = vpop.f32.mrf.mxu0
    %1439 = vmatprep.mubr.bf16.mxu0 0
    %1440 = vmatmul.mubr.bf16.gmra.mxu0 %v1397
    %v1441 = vpop.f32.mrf.mxu0
    %v1442 = vadd.f32 0.0, %v1441
    %v1443 = vpop.f32.mrf.mxu0
    %v1444 = vpop.f32.mrf.mxu0
    %v1445 = vadd.f32 0.0, %v1444
    %v1446 = vpop.f32.mrf.mxu0
    %1447 = vdwg.mxu0
    %v1448 = vpack.c.bf16 %v1437, %v1434
    %v1449 = vpack.c.bf16 %v1445, %v1442
    %v1450 = vld [vmem:[#allocation11] sm:$0xf]
    %v1452 = vsel %vm591, %v1448, 0
    %v1455 = vsel %vm591, %v1449, 0
    %vm1457 = vcmask 1043456
    %v1459 = vsel %vm1457, %v1450, 0
    %1461 = vmatprep.subr.bf16.mxu0 0
    %1462 = vmatpush1.bf16.msra.mxu0 0
    %1463 = vmatprep.subr.bf16.mxu0 0
    %1464 = vmatpush1.bf16.msra.mxu0 0
    %1465 = vmatprep.subr.bf16.mxu0 0
    %1466 = vmatpush1.bf16.msra.mxu0 0
    %1467 = vmatprep.subr.bf16.mxu0 0
    %1468 = vmatpush1.bf16.msra.mxu0 0
    %1469 = vmatprep.subr.bf16.mxu0 0
    %1470 = vmatpush1.bf16.msra.mxu0 0
    %1471 = vmatprep.subr.bf16.mxu0 0
    %1472 = vmatpush1.bf16.msra.mxu0 0
    %1473 = vmatprep.subr.bf16.mxu0 0
    %1474 = vmatpush1.bf16.msra.mxu0 0
    %1475 = vmatprep.subr.bf16.mxu0 0
    %1476 = vmatpush1.bf16.msra.mxu0 %v1459
    %1477 = vmatprep.subr.bf16.mxu0 0
    %1478 = vmatpush2.bf16.msra.mxu0 0
    %1479 = vmatprep.subr.bf16.mxu0 0
    %1480 = vmatpush2.bf16.msra.mxu0 0
    %1481 = vmatprep.subr.bf16.mxu0 0
    %1482 = vmatpush2.bf16.msra.mxu0 0
    %1483 = vmatprep.subr.bf16.mxu0 0
    %1484 = vmatpush2.bf16.msra.mxu0 0
    %1485 = vmatprep.subr.bf16.mxu0 0
    %1486 = vmatpush2.bf16.msra.mxu0 0
    %1487 = vmatprep.subr.bf16.mxu0 0
    %1488 = vmatpush2.bf16.msra.mxu0 0
    %1489 = vmatprep.subr.bf16.mxu0 0
    %1490 = vmatpush2.bf16.msra.mxu0 0
    %1491 = vmatprep.subr.bf16.mxu0 0
    %1492 = vmatpush2.bf16.msra.mxu0 0
    %1493 = vmatprep.mubr.bf16.mxu0 0
    %1494 = vmatmul.mubr.bf16.gmra.mxu0 %v1452
    %v1495 = vpop.f32.mrf.mxu0
    %v1496 = vadd.f32 0.0, %v1495
    %v1497 = vpop.f32.mrf.mxu0
    %v1498 = vpop.f32.mrf.mxu0
    %v1499 = vadd.f32 0.0, %v1498
    %v1500 = vpop.f32.mrf.mxu0
    %1501 = vmatprep.mubr.bf16.mxu0 0
    %1502 = vmatmul.mubr.bf16.gmra.mxu0 %v1455
    %v1503 = vpop.f32.mrf.mxu0
    %v1504 = vadd.f32 0.0, %v1503
    %v1505 = vpop.f32.mrf.mxu0
    %v1506 = vpop.f32.mrf.mxu0
    %v1507 = vadd.f32 0.0, %v1506
    %v1508 = vpop.f32.mrf.mxu0
    %1509 = vdwg.mxu0
    %v1510 = vadd.f32 %v1373, %v1496
    %v1511 = vadd.f32 %v1376, %v1499
    %v1512 = vadd.f32 %v1381, %v1504
    %v1513 = vadd.f32 %v1384, %v1507
    %1514 = vrot.lane.b32.xlu0 %v583, 56
    %v1515 = vpop.permute.xlu0 %1514
    %1516 = vrot.lane.b32.xlu0 %v584, 56
    %v1517 = vpop.permute.xlu0 %1516
    %v1521 = vsel %vm145, %v1309, 0
    %v1524 = vsel %vm145, %v1310, 0
    %1526 = vmatprep.subr.bf16.mxu0 0
    %1527 = vmatpush1.bf16.msra.mxu0 0
    %1528 = vmatprep.subr.bf16.mxu0 0
    %1529 = vmatpush1.bf16.msra.mxu0 0
    %1530 = vmatprep.subr.bf16.mxu0 0
    %1531 = vmatpush1.bf16.msra.mxu0 0
    %1532 = vmatprep.subr.bf16.mxu0 0
    %1533 = vmatpush1.bf16.msra.mxu0 0
    %1534 = vmatprep.subr.bf16.mxu0 0
    %1535 = vmatpush1.bf16.msra.mxu0 0
    %1536 = vmatprep.subr.bf16.mxu0 0
    %1537 = vmatpush1.bf16.msra.mxu0 0
    %1538 = vmatprep.subr.bf16.mxu0 0
    %1539 = vmatpush1.bf16.msra.mxu0 %v1517
    %1540 = vmatprep.subr.bf16.mxu0 0
    %1541 = vmatpush1.bf16.msra.mxu0 %v1515
    %1542 = vmatprep.subr.bf16.mxu0 0
    %1543 = vmatpush2.bf16.msra.mxu0 0
    %1544 = vmatprep.subr.bf16.mxu0 0
    %1545 = vmatpush2.bf16.msra.mxu0 0
    %1546 = vmatprep.subr.bf16.mxu0 0
    %1547 = vmatpush2.bf16.msra.mxu0 0
    %1548 = vmatprep.subr.bf16.mxu0 0
    %1549 = vmatpush2.bf16.msra.mxu0 0
    %1550 = vmatprep.subr.bf16.mxu0 0
    %1551 = vmatpush2.bf16.msra.mxu0 0
    %1552 = vmatprep.subr.bf16.mxu0 0
    %1553 = vmatpush2.bf16.msra.mxu0 0
    %1554 = vmatprep.subr.bf16.mxu0 0
    %1555 = vmatpush2.bf16.msra.mxu0 0
    %1556 = vmatprep.subr.bf16.mxu0 0
    %1557 = vmatpush2.bf16.msra.mxu0 0
    %1558 = vmatprep.mubr.bf16.mxu0 0
    %1559 = vmatmul.mubr.bf16.gmra.mxu0 %v1521
    %v1560 = vpop.f32.mrf.mxu0
    %v1561 = vadd.f32 0.0, %v1560
    %v1562 = vpop.f32.mrf.mxu0
    %v1563 = vpop.f32.mrf.mxu0
    %v1564 = vadd.f32 0.0, %v1563
    %v1565 = vpop.f32.mrf.mxu0
    %1566 = vmatprep.mubr.bf16.mxu0 0
    %1567 = vmatmul.mubr.bf16.gmra.mxu0 %v1524
    %v1568 = vpop.f32.mrf.mxu0
    %v1569 = vadd.f32 0.0, %v1568
    %v1570 = vpop.f32.mrf.mxu0
    %v1571 = vpop.f32.mrf.mxu0
    %v1572 = vadd.f32 0.0, %v1571
    %v1573 = vpop.f32.mrf.mxu0
    %1574 = vdwg.mxu0
    %v1575 = vpack.c.bf16 %v1564, %v1561
    %v1576 = vpack.c.bf16 %v1572, %v1569
    %v1577 = vld [vmem:[#allocation11 + $0x4] sm:$0xf]
    %v1579 = vsel %vm591, %v1575, 0
    %v1582 = vsel %vm591, %v1576, 0
    %v1585 = vsel %vm1457, %v1577, 0
    %1587 = vmatprep.subr.bf16.mxu0 0
    %1588 = vmatpush1.bf16.msra.mxu0 0
    %1589 = vmatprep.subr.bf16.mxu0 0
    %1590 = vmatpush1.bf16.msra.mxu0 0
    %1591 = vmatprep.subr.bf16.mxu0 0
    %1592 = vmatpush1.bf16.msra.mxu0 0
    %1593 = vmatprep.subr.bf16.mxu0 0
    %1594 = vmatpush1.bf16.msra.mxu0 0
    %1595 = vmatprep.subr.bf16.mxu0 0
    %1596 = vmatpush1.bf16.msra.mxu0 0
    %1597 = vmatprep.subr.bf16.mxu0 0
    %1598 = vmatpush1.bf16.msra.mxu0 0
    %1599 = vmatprep.subr.bf16.mxu0 0
    %1600 = vmatpush1.bf16.msra.mxu0 0
    %1601 = vmatprep.subr.bf16.mxu0 0
    %1602 = vmatpush1.bf16.msra.mxu0 %v1585
    %1603 = vmatprep.subr.bf16.mxu0 0
    %1604 = vmatpush2.bf16.msra.mxu0 0
    %1605 = vmatprep.subr.bf16.mxu0 0
    %1606 = vmatpush2.bf16.msra.mxu0 0
    %1607 = vmatprep.subr.bf16.mxu0 0
    %1608 = vmatpush2.bf16.msra.mxu0 0
    %1609 = vmatprep.subr.bf16.mxu0 0
    %1610 = vmatpush2.bf16.msra.mxu0 0
    %1611 = vmatprep.subr.bf16.mxu0 0
    %1612 = vmatpush2.bf16.msra.mxu0 0
    %1613 = vmatprep.subr.bf16.mxu0 0
    %1614 = vmatpush2.bf16.msra.mxu0 0
    %1615 = vmatprep.subr.bf16.mxu0 0
    %1616 = vmatpush2.bf16.msra.mxu0 0
    %1617 = vmatprep.subr.bf16.mxu0 0
    %1618 = vmatpush2.bf16.msra.mxu0 0
    %1619 = vmatprep.mubr.bf16.mxu0 0
    %1620 = vmatmul.mubr.bf16.gmra.mxu0 %v1579
    %v1621 = vpop.f32.mrf.mxu0
    %v1622 = vadd.f32 0.0, %v1621
    %v1623 = vpop.f32.mrf.mxu0
    %v1624 = vpop.f32.mrf.mxu0
    %v1625 = vadd.f32 0.0, %v1624
    %v1626 = vpop.f32.mrf.mxu0
    %1627 = vmatprep.mubr.bf16.mxu0 0
    %1628 = vmatmul.mubr.bf16.gmra.mxu0 %v1582
    %v1629 = vpop.f32.mrf.mxu0
    %v1630 = vadd.f32 0.0, %v1629
    %v1631 = vpop.f32.mrf.mxu0
    %v1632 = vpop.f32.mrf.mxu0
    %v1633 = vadd.f32 0.0, %v1632
    %v1634 = vpop.f32.mrf.mxu0
    %1635 = vdwg.mxu0
    %v1636 = vadd.f32 %v1510, %v1622
    %v1637 = vadd.f32 %v1511, %v1625
    %v1638 = vadd.f32 %v1512, %v1630
    %v1639 = vadd.f32 %v1513, %v1633
    %1640 = vrot.lane.b32.xlu0 %v583, 48
    %v1641 = vpop.permute.xlu0 %1640
    %1642 = vrot.lane.b32.xlu0 %v584, 48
    %v1643 = vpop.permute.xlu0 %1642
    %v1647 = vsel %vm145, %v1311, 0
    %v1650 = vsel %vm145, %v1312, 0
    %1652 = vmatprep.subr.bf16.mxu0 0
    %1653 = vmatpush1.bf16.msra.mxu0 0
    %1654 = vmatprep.subr.bf16.mxu0 0
    %1655 = vmatpush1.bf16.msra.mxu0 0
    %1656 = vmatprep.subr.bf16.mxu0 0
    %1657 = vmatpush1.bf16.msra.mxu0 0
    %1658 = vmatprep.subr.bf16.mxu0 0
    %1659 = vmatpush1.bf16.msra.mxu0 0
    %1660 = vmatprep.subr.bf16.mxu0 0
    %1661 = vmatpush1.bf16.msra.mxu0 0
    %1662 = vmatprep.subr.bf16.mxu0 0
    %1663 = vmatpush1.bf16.msra.mxu0 0
    %1664 = vmatprep.subr.bf16.mxu0 0
    %1665 = vmatpush1.bf16.msra.mxu0 %v1643
    %1666 = vmatprep.subr.bf16.mxu0 0
    %1667 = vmatpush1.bf16.msra.mxu0 %v1641
    %1668 = vmatprep.subr.bf16.mxu0 0
    %1669 = vmatpush2.bf16.msra.mxu0 0
    %1670 = vmatprep.subr.bf16.mxu0 0
    %1671 = vmatpush2.bf16.msra.mxu0 0
    %1672 = vmatprep.subr.bf16.mxu0 0
    %1673 = vmatpush2.bf16.msra.mxu0 0
    %1674 = vmatprep.subr.bf16.mxu0 0
    %1675 = vmatpush2.bf16.msra.mxu0 0
    %1676 = vmatprep.subr.bf16.mxu0 0
    %1677 = vmatpush2.bf16.msra.mxu0 0
    %1678 = vmatprep.subr.bf16.mxu0 0
    %1679 = vmatpush2.bf16.msra.mxu0 0
    %1680 = vmatprep.subr.bf16.mxu0 0
    %1681 = vmatpush2.bf16.msra.mxu0 0
    %1682 = vmatprep.subr.bf16.mxu0 0
    %1683 = vmatpush2.bf16.msra.mxu0 0
    %1684 = vmatprep.mubr.bf16.mxu0 0
    %1685 = vmatmul.mubr.bf16.gmra.mxu0 %v1647
    %v1686 = vpop.f32.mrf.mxu0
    %v1687 = vadd.f32 0.0, %v1686
    %v1688 = vpop.f32.mrf.mxu0
    %v1689 = vpop.f32.mrf.mxu0
    %v1690 = vadd.f32 0.0, %v1689
    %v1691 = vpop.f32.mrf.mxu0
    %1692 = vmatprep.mubr.bf16.mxu0 0
    %1693 = vmatmul.mubr.bf16.gmra.mxu0 %v1650
    %v1694 = vpop.f32.mrf.mxu0
    %v1695 = vadd.f32 0.0, %v1694
    %v1696 = vpop.f32.mrf.mxu0
    %v1697 = vpop.f32.mrf.mxu0
    %v1698 = vadd.f32 0.0, %v1697
    %v1699 = vpop.f32.mrf.mxu0
    %1700 = vdwg.mxu0
    %v1701 = vpack.c.bf16 %v1690, %v1687
    %v1702 = vpack.c.bf16 %v1698, %v1695
    %v1703 = vld [vmem:[#allocation11 + $0x8] sm:$0xf]
    %v1705 = vsel %vm591, %v1701, 0
    %v1708 = vsel %vm591, %v1702, 0
    %v1711 = vsel %vm1457, %v1703, 0
    %1713 = vmatprep.subr.bf16.mxu0 0
    %1714 = vmatpush1.bf16.msra.mxu0 0
    %1715 = vmatprep.subr.bf16.mxu0 0
    %1716 = vmatpush1.bf16.msra.mxu0 0
    %1717 = vmatprep.subr.bf16.mxu0 0
    %1718 = vmatpush1.bf16.msra.mxu0 0
    %1719 = vmatprep.subr.bf16.mxu0 0
    %1720 = vmatpush1.bf16.msra.mxu0 0
    %1721 = vmatprep.subr.bf16.mxu0 0
    %1722 = vmatpush1.bf16.msra.mxu0 0
    %1723 = vmatprep.subr.bf16.mxu0 0
    %1724 = vmatpush1.bf16.msra.mxu0 0
    %1725 = vmatprep.subr.bf16.mxu0 0
    %1726 = vmatpush1.bf16.msra.mxu0 0
    %1727 = vmatprep.subr.bf16.mxu0 0
    %1728 = vmatpush1.bf16.msra.mxu0 %v1711
    %1729 = vmatprep.subr.bf16.mxu0 0
    %1730 = vmatpush2.bf16.msra.mxu0 0
    %1731 = vmatprep.subr.bf16.mxu0 0
    %1732 = vmatpush2.bf16.msra.mxu0 0
    %1733 = vmatprep.subr.bf16.mxu0 0
    %1734 = vmatpush2.bf16.msra.mxu0 0
    %1735 = vmatprep.subr.bf16.mxu0 0
    %1736 = vmatpush2.bf16.msra.mxu0 0
    %1737 = vmatprep.subr.bf16.mxu0 0
    %1738 = vmatpush2.bf16.msra.mxu0 0
    %1739 = vmatprep.subr.bf16.mxu0 0
    %1740 = vmatpush2.bf16.msra.mxu0 0
    %1741 = vmatprep.subr.bf16.mxu0 0
    %1742 = vmatpush2.bf16.msra.mxu0 0
    %1743 = vmatprep.subr.bf16.mxu0 0
    %1744 = vmatpush2.bf16.msra.mxu0 0
    %1745 = vmatprep.mubr.bf16.mxu0 0
    %1746 = vmatmul.mubr.bf16.gmra.mxu0 %v1705
    %v1747 = vpop.f32.mrf.mxu0
    %v1748 = vadd.f32 0.0, %v1747
    %v1749 = vpop.f32.mrf.mxu0
    %v1750 = vpop.f32.mrf.mxu0
    %v1751 = vadd.f32 0.0, %v1750
    %v1752 = vpop.f32.mrf.mxu0
    %1753 = vmatprep.mubr.bf16.mxu0 0
    %1754 = vmatmul.mubr.bf16.gmra.mxu0 %v1708
    %v1755 = vpop.f32.mrf.mxu0
    %v1756 = vadd.f32 0.0, %v1755
    %v1757 = vpop.f32.mrf.mxu0
    %v1758 = vpop.f32.mrf.mxu0
    %v1759 = vadd.f32 0.0, %v1758
    %v1760 = vpop.f32.mrf.mxu0
    %1761 = vdwg.mxu0
    %v1762 = vadd.f32 %v1636, %v1748
    %v1763 = vadd.f32 %v1637, %v1751
    %v1764 = vadd.f32 %v1638, %v1756
    %v1765 = vadd.f32 %v1639, %v1759
    %1766 = vrot.lane.b32.xlu0 %v583, 40
    %v1767 = vpop.permute.xlu0 %1766
    %1768 = vrot.lane.b32.xlu0 %v584, 40
    %v1769 = vpop.permute.xlu0 %1768
    %v1773 = vsel %vm145, %v1313, 0
    %v1776 = vsel %vm145, %v1314, 0
    %1778 = vmatprep.subr.bf16.mxu0 0
    %1779 = vmatpush1.bf16.msra.mxu0 0
    %1780 = vmatprep.subr.bf16.mxu0 0
    %1781 = vmatpush1.bf16.msra.mxu0 0
    %1782 = vmatprep.subr.bf16.mxu0 0
    %1783 = vmatpush1.bf16.msra.mxu0 0
    %1784 = vmatprep.subr.bf16.mxu0 0
    %1785 = vmatpush1.bf16.msra.mxu0 0
    %1786 = vmatprep.subr.bf16.mxu0 0
    %1787 = vmatpush1.bf16.msra.mxu0 0
    %1788 = vmatprep.subr.bf16.mxu0 0
    %1789 = vmatpush1.bf16.msra.mxu0 0
    %1790 = vmatprep.subr.bf16.mxu0 0
    %1791 = vmatpush1.bf16.msra.mxu0 %v1769
    %1792 = vmatprep.subr.bf16.mxu0 0
    %1793 = vmatpush1.bf16.msra.mxu0 %v1767
    %1794 = vmatprep.subr.bf16.mxu0 0
    %1795 = vmatpush2.bf16.msra.mxu0 0
    %1796 = vmatprep.subr.bf16.mxu0 0
    %1797 = vmatpush2.bf16.msra.mxu0 0
    %1798 = vmatprep.subr.bf16.mxu0 0
    %1799 = vmatpush2.bf16.msra.mxu0 0
    %1800 = vmatprep.subr.bf16.mxu0 0
    %1801 = vmatpush2.bf16.msra.mxu0 0
    %1802 = vmatprep.subr.bf16.mxu0 0
    %1803 = vmatpush2.bf16.msra.mxu0 0
    %1804 = vmatprep.subr.bf16.mxu0 0
    %1805 = vmatpush2.bf16.msra.mxu0 0
    %1806 = vmatprep.subr.bf16.mxu0 0
    %1807 = vmatpush2.bf16.msra.mxu0 0
    %1808 = vmatprep.subr.bf16.mxu0 0
    %1809 = vmatpush2.bf16.msra.mxu0 0
    %1810 = vmatprep.mubr.bf16.mxu0 0
    %1811 = vmatmul.mubr.bf16.gmra.mxu0 %v1773
    %v1812 = vpop.f32.mrf.mxu0
    %v1813 = vadd.f32 0.0, %v1812
    %v1814 = vpop.f32.mrf.mxu0
    %v1815 = vpop.f32.mrf.mxu0
    %v1816 = vadd.f32 0.0, %v1815
    %v1817 = vpop.f32.mrf.mxu0
    %1818 = vmatprep.mubr.bf16.mxu0 0
    %1819 = vmatmul.mubr.bf16.gmra.mxu0 %v1776
    %v1820 = vpop.f32.mrf.mxu0
    %v1821 = vadd.f32 0.0, %v1820
    %v1822 = vpop.f32.mrf.mxu0
    %v1823 = vpop.f32.mrf.mxu0
    %v1824 = vadd.f32 0.0, %v1823
    %v1825 = vpop.f32.mrf.mxu0
    %1826 = vdwg.mxu0
    %v1827 = vpack.c.bf16 %v1816, %v1813
    %v1828 = vpack.c.bf16 %v1824, %v1821
    %v1829 = vld [vmem:[#allocation11 + $0xc] sm:$0xf]
    %v1831 = vsel %vm591, %v1827, 0
    %v1834 = vsel %vm591, %v1828, 0
    %v1837 = vsel %vm1457, %v1829, 0
    %1839 = vmatprep.subr.bf16.mxu0 0
    %1840 = vmatpush1.bf16.msra.mxu0 0
    %1841 = vmatprep.subr.bf16.mxu0 0
    %1842 = vmatpush1.bf16.msra.mxu0 0
    %1843 = vmatprep.subr.bf16.mxu0 0
    %1844 = vmatpush1.bf16.msra.mxu0 0
    %1845 = vmatprep.subr.bf16.mxu0 0
    %1846 = vmatpush1.bf16.msra.mxu0 0
    %1847 = vmatprep.subr.bf16.mxu0 0
    %1848 = vmatpush1.bf16.msra.mxu0 0
    %1849 = vmatprep.subr.bf16.mxu0 0
    %1850 = vmatpush1.bf16.msra.mxu0 0
    %1851 = vmatprep.subr.bf16.mxu0 0
    %1852 = vmatpush1.bf16.msra.mxu0 0
    %1853 = vmatprep.subr.bf16.mxu0 0
    %1854 = vmatpush1.bf16.msra.mxu0 %v1837
    %1855 = vmatprep.subr.bf16.mxu0 0
    %1856 = vmatpush2.bf16.msra.mxu0 0
    %1857 = vmatprep.subr.bf16.mxu0 0
    %1858 = vmatpush2.bf16.msra.mxu0 0
    %1859 = vmatprep.subr.bf16.mxu0 0
    %1860 = vmatpush2.bf16.msra.mxu0 0
    %1861 = vmatprep.subr.bf16.mxu0 0
    %1862 = vmatpush2.bf16.msra.mxu0 0
    %1863 = vmatprep.subr.bf16.mxu0 0
    %1864 = vmatpush2.bf16.msra.mxu0 0
    %1865 = vmatprep.subr.bf16.mxu0 0
    %1866 = vmatpush2.bf16.msra.mxu0 0
    %1867 = vmatprep.subr.bf16.mxu0 0
    %1868 = vmatpush2.bf16.msra.mxu0 0
    %1869 = vmatprep.subr.bf16.mxu0 0
    %1870 = vmatpush2.bf16.msra.mxu0 0
    %1871 = vmatprep.mubr.bf16.mxu0 0
    %1872 = vmatmul.mubr.bf16.gmra.mxu0 %v1831
    %v1873 = vpop.f32.mrf.mxu0
    %v1874 = vadd.f32 0.0, %v1873
    %v1875 = vpop.f32.mrf.mxu0
    %v1876 = vpop.f32.mrf.mxu0
    %v1877 = vadd.f32 0.0, %v1876
    %v1878 = vpop.f32.mrf.mxu0
    %1879 = vmatprep.mubr.bf16.mxu0 0
    %1880 = vmatmul.mubr.bf16.gmra.mxu0 %v1834
    %v1881 = vpop.f32.mrf.mxu0
    %v1882 = vadd.f32 0.0, %v1881
    %v1883 = vpop.f32.mrf.mxu0
    %v1884 = vpop.f32.mrf.mxu0
    %v1885 = vadd.f32 0.0, %v1884
    %v1886 = vpop.f32.mrf.mxu0
    %1887 = vdwg.mxu0
    %v1888 = vadd.f32 %v1762, %v1874
    %v1889 = vadd.f32 %v1763, %v1877
    %v1890 = vadd.f32 %v1764, %v1882
    %v1891 = vadd.f32 %v1765, %v1885
    %1892 = vmax.xlane.f32.xlu0 %v1888
    %v1893 = vpop.xlane.xlu0 %1892
    %1894 = vmax.xlane.f32.xlu0 %v1889
    %v1895 = vpop.xlane.xlu0 %1894
    %1896 = vmax.xlane.f32.xlu0 %v1890
    %v1897 = vpop.xlane.xlu0 %1896
    %1898 = vmax.xlane.f32.xlu0 %v1891
    %v1899 = vpop.xlane.xlu0 %1898
    %v1900 = vsub.f32 %v1888, %v1893
    %v1901 = vsub.f32 %v1889, %v1895
    %v1902 = vsub.f32 %v1890, %v1897
    %v1903 = vsub.f32 %v1891, %v1899
    %v1904 = vmul.f32 %v1900, 1.442695
    %v1905 = vpow.pop %v1904
    %v1906 = vmul.f32 %v1901, 1.442695
    %v1907 = vpow.pop %v1906
    %v1908 = vmul.f32 %v1902, 1.442695
    %v1909 = vpow.pop %v1908
    %v1910 = vmul.f32 %v1903, 1.442695
    %v1911 = vpow.pop %v1910
    %1912 = vadd.xlane.f32.xlu0 %v1905
    %v1913 = vpop.xlane.xlu0 %1912
    %1914 = vadd.xlane.f32.xlu0 %v1907
    %v1915 = vpop.xlane.xlu0 %1914
    %1916 = vadd.xlane.f32.xlu0 %v1909
    %v1917 = vpop.xlane.xlu0 %1916
    %1918 = vadd.xlane.f32.xlu0 %v1911
    %v1919 = vpop.xlane.xlu0 %1918
    %v1920 = vlog2.pop %v1913
    %v1921 = vmul.f32 %v1920, 0.6931472
    %v1922 = vlog2.pop %v1915
    %v1923 = vmul.f32 %v1922, 0.6931472
    %v1924 = vlog2.pop %v1917
    %v1925 = vmul.f32 %v1924, 0.6931472
    %v1926 = vlog2.pop %v1919
    %v1927 = vmul.f32 %v1926, 0.6931472
    %v1928 = vsub.f32 %v1900, %v1921
    %v1929 = vsub.f32 %v1901, %v1923
    %v1930 = vsub.f32 %v1902, %v1925
    %v1931 = vsub.f32 %v1903, %v1927
    %1932 = vst [vmem:[#allocation13] sm:$0xff] %v1928
    %1933 = vst [vmem:[#allocation13 + $0x8] sm:$0xff] %v1929
    %1934 = vst [vmem:[#allocation13 + $0x10] sm:$0xff] %v1930
    %1935 = vst [vmem:[#allocation13 + $0x18] sm:$0xff] %v1931
    // Predicated region
    $region62: #{tpu_custom_call.1} parent=1 // pred_check
      _
    $region63: #{tpu_custom_call.1} parent=1 // pred_check_branch
      %1937 = sbr.rel (0) target = $region65
    $region64: #{tpu_custom_call.1} parent=1 // pred_region
      %s1939 = ssub.s32 512, 512
      %1940 = vsyncadd [#allocation4], %s1939
      %s1941 = sshll.u32 [#allocation13], 4
      %s1942 = int_to_ptr.vmem [resolvable:$true] %s1941
      %1947 = dma.vmem_to_hbm [thread:$0]  %s1942, 512, %s9, [#allocation4], 128, 128, 8
    $region65: #{tpu_custom_call.1} parent=1 // pred_fallthru
      _
    // Predicated region
    $region66: #{tpu_custom_call.1} parent=1 // pred_check
      _
    $region67: #{tpu_custom_call.1} parent=1 // pred_check_branch
      %1949 = sbr.rel (0) target = $region69
    $region68: #{tpu_custom_call.1} parent=1 // pred_region
      %1950 = dma.done [#allocation4], 512
    $region69: #{tpu_custom_call.1} parent=1 // pred_fallthru
      _
    %1951 = vsyncpa [#allocation3], 1
    %1952 = vsyncpa [#allocation6], 1
    %1953 = vsyncpa [#allocation9], 1
    %1954 = vsyncpa [#allocation12], 1
    %1955 = vsyncpa [#allocation4], 1

</llo_original>
